<compile_context>
chip_gen: v7x
topology: tpu7x:2x2x1
jax: 0.10.0
libtpu: 0.0.40
codegen_flags: <defaults>
</compile_context>

<pallas_src>
import math

import jax
import jax.numpy as jnp
from jax.experimental import pallas as pl
from jax.experimental.pallas import tpu as pltpu

# ----------------------------- configuration --------------------------------
NUM_CLASSES = 10
NUM_SEGMENTS = 8              # S
C, H, W = 3, 16, 16
CHW = C * H * W               # 768 (multiple of 128 -> lane-aligned segment slices)
FRAME_FEATURE_DIM = 32        # stand-in for resnet50's 2048-dim last features
VIDEO_FEATURE_DIM = 64
FRAME_BOTTLENECK_DIM = 1024   # TRN default; becomes relation_size in HTRN
RELATION_BOTTLENECK = 512     # Relation's default bottleneck_dim
BATCH = 2

B_PAD = ((BATCH + 7) // 8) * 8        # pad rows to a full sublane tile (>= 8)
NUM_CLASSES_PAD = 128                 # lane-dense output slab width

# HierarchicalRelation._prepare_module (with relation_size = FRAME_BOTTLENECK_DIM)
_DEPTH = int(math.ceil((NUM_SEGMENTS - FRAME_BOTTLENECK_DIM) /
                       (FRAME_BOTTLENECK_DIM - 1)))
_DEPTH = max(_DEPTH, 0)       # np.ceil of a negative fraction -> -0.0 -> 0
_NUM_INPUTS_FINAL = NUM_SEGMENTS + _DEPTH * (1 - FRAME_BOTTLENECK_DIM)
assert _DEPTH == 0 and _NUM_INPUTS_FINAL == NUM_SEGMENTS, (
    "With TRN's default HTRN wiring depth==0; the depth>0 branch is "
    "unreachable (and ill-formed: torch.stack of unequal shapes).")


# ------------------------------ fused Pallas kernel ---------------------------
def _trn_fused_kernel(x_ref, base_w_ref, base_b_ref,
                      rel_w1_ref, rel_b1_ref, rel_w2_ref, rel_b2_ref,
                      last_w_ref, last_b_ref, o_ref):
    """Entire TRN forward in one kernel; all intermediates stay on-chip.

    x_ref      : (S*B_PAD, CHW) f32, segment-major rows (seg s -> rows s*B_PAD..)
    base_w_ref : (CHW, D)        bf16   base_b_ref : (1, D)    f32
    rel_w1_ref : (S*D, BN)       bf16   rel_b1_ref : (1, BN)   f32
    rel_w2_ref : (BN, V)         bf16   rel_b2_ref : (1, V)    f32
    last_w_ref : (V, NPAD)       bf16   last_b_ref : (1, NPAD) f32 (zero-padded)
    o_ref      : (B_PAD, NPAD)   f32    lane-dense output slab
    """
    f32, bf16 = jnp.float32, jnp.bfloat16

    # ---- base stand-in: per-frame flatten -> Linear -> ReLU (one big matmul).
    x_bf = x_ref[...].astype(bf16)                               # (S*B_PAD, CHW)
    base = jnp.dot(x_bf, base_w_ref[...], preferred_element_type=f32)
    base = jnp.maximum(base + base_b_ref[...], 0.0)              # (S*B_PAD, D) f32
    # Relation's leading nn.ReLU() is idempotent after the ReLU above.
    base_bf = base.astype(bf16)

    # ---- Relation layer 1: Linear(S*D -> BN) on the segment-concatenated
    #      features, expressed as sum_s (B_PAD, D) @ (D, BN) so no
    #      (B*S, D) -> (B, S*D) relayout is needed inside the kernel.
    acc = jnp.zeros((B_PAD, RELATION_BOTTLENECK), f32)
    for s in range(NUM_SEGMENTS):                                # static, S=8
        fs = base_bf[s * B_PAD:(s + 1) * B_PAD, :]               # (B_PAD, D)
        ws = rel_w1_ref[s * FRAME_FEATURE_DIM:(s + 1) * FRAME_FEATURE_DIM, :]
        acc = acc + jnp.dot(fs, ws, preferred_element_type=f32)
    h1 = jnp.maximum(acc + rel_b1_ref[...], 0.0)                 # (B_PAD, BN) f32

    # ---- Relation layer 2: Linear(BN -> V)
    rel_out = jnp.dot(h1.astype(bf16), rel_w2_ref[...],
                      preferred_element_type=f32) + rel_b2_ref[...]   # (B_PAD, V)
    # HTRN depth==0: torch.stack([out]).mean(0).squeeze() is the identity here.

    # ---- last_linear: Linear(V -> num_classes), padded to 128 lanes so the
    #      store is a full unmasked vst; wrapper slices the valid columns.
    logits = jnp.dot(rel_out.astype(bf16), last_w_ref[...],
                     preferred_element_type=f32) + last_b_ref[...]    # (B_PAD, NPAD)
    o_ref[...] = logits


# ------------------------------- parameters ----------------------------------
def _init_linear(key, fan_in, fan_out):
    kw, kb = jax.random.split(key)
    bound = 1.0 / math.sqrt(fan_in)
    w = jax.random.uniform(kw, (fan_in, fan_out), jnp.float32, -bound, bound)
    b = jax.random.uniform(kb, (fan_out,), jnp.float32, -bound, bound)
    return w, b


def init_params(key):
    k_base, k_r1, k_r2, k_last = jax.random.split(key, 4)
    # TODO(synk): stand-in backbone for ResNet-50 (flatten -> Linear -> ReLU).
    base_w, base_b = _init_linear(k_base, CHW, FRAME_FEATURE_DIM)
    # HTRN final Relation: ReLU, Linear(S*D, 512), ReLU, Linear(512, V)
    rel_w1, rel_b1 = _init_linear(
        k_r1, _NUM_INPUTS_FINAL * FRAME_FEATURE_DIM, RELATION_BOTTLENECK)
    rel_w2, rel_b2 = _init_linear(k_r2, RELATION_BOTTLENECK, VIDEO_FEATURE_DIM)
    # last_linear: Linear(V, num_classes); pad N to 128 (zeros) for lane-dense store.
    last_w, last_b = _init_linear(k_last, VIDEO_FEATURE_DIM, NUM_CLASSES)
    last_w_pad = jnp.zeros((VIDEO_FEATURE_DIM, NUM_CLASSES_PAD),
                           jnp.float32).at[:, :NUM_CLASSES].set(last_w)
    last_b_pad = jnp.zeros((NUM_CLASSES_PAD,),
                           jnp.float32).at[:NUM_CLASSES].set(last_b)

    # Weights pre-cast to bf16 (MXU operands); biases stay f32 (VPU adds in f32).
    return {
        "base_w": base_w.astype(jnp.bfloat16),
        "base_b": base_b.reshape(1, FRAME_FEATURE_DIM),
        "rel_w1": rel_w1.astype(jnp.bfloat16),
        "rel_b1": rel_b1.reshape(1, RELATION_BOTTLENECK),
        "rel_w2": rel_w2.astype(jnp.bfloat16),
        "rel_b2": rel_b2.reshape(1, VIDEO_FEATURE_DIM),
        "last_w": last_w_pad.astype(jnp.bfloat16),
        "last_b": last_b_pad.reshape(1, NUM_CLASSES_PAD),
    }


# -------------------------------- forward ------------------------------------
def trn_forward(params, x):
    """x: (B, num_segments*3, H, W) float32 -> logits (B, num_classes)."""
    batch = x.shape[0]
    assert batch <= B_PAD

    # features(): input.view(-1, 3, H, W) -> per-frame flatten (C*H*W).
    # Lay frames out segment-major and pad the batch to B_PAD rows per segment
    # so every per-segment row slice in the kernel is sublane-aligned.
    frames = x.reshape(batch, NUM_SEGMENTS, CHW)                 # (B, S, CHW)
    frames = jnp.transpose(frames, (1, 0, 2))                    # (S, B, CHW)
    frames = jnp.pad(frames, ((0, 0), (0, B_PAD - batch), (0, 0)))
    x_sm = frames.reshape(NUM_SEGMENTS * B_PAD, CHW)             # (S*B_PAD, CHW)

    operands = (x_sm,
                params["base_w"], params["base_b"],
                params["rel_w1"], params["rel_b1"],
                params["rel_w2"], params["rel_b2"],
                params["last_w"], params["last_b"])

    flops = 2 * (NUM_SEGMENTS * B_PAD * CHW * FRAME_FEATURE_DIM
                 + NUM_SEGMENTS * B_PAD * FRAME_FEATURE_DIM * RELATION_BOTTLENECK
                 + B_PAD * RELATION_BOTTLENECK * VIDEO_FEATURE_DIM
                 + B_PAD * VIDEO_FEATURE_DIM * NUM_CLASSES_PAD)
    bytes_accessed = (sum(int(a.size) * a.dtype.itemsize for a in operands)
                      + B_PAD * NUM_CLASSES_PAD * 4)

    vmem = pltpu.MemorySpace.VMEM
    out = pl.pallas_call(
        _trn_fused_kernel,
        out_shape=jax.ShapeDtypeStruct((B_PAD, NUM_CLASSES_PAD), jnp.float32),
        in_specs=[pl.BlockSpec(memory_space=vmem)] * len(operands),
        out_specs=pl.BlockSpec(memory_space=vmem),
        cost_estimate=pl.CostEstimate(flops=flops, transcendentals=0,
                                      bytes_accessed=bytes_accessed),
    )(*operands)

    # Drop the padded rows / lanes (avoids the old jnp.squeeze() batch==1 bug).
    return out[:batch, :NUM_CLASSES]


# ---------------------------------- main --------------------------------------
if __name__ == "__main__":
    key = jax.random.PRNGKey(0)
    k_param, k_input = jax.random.split(key)

    params = init_params(k_param)
    x = jax.random.normal(k_input, (BATCH, NUM_SEGMENTS * C, H, W),
                          dtype=jnp.float32)

    logits = jax.jit(trn_forward)(params, x)
    logits = jax.block_until_ready(logits)

    assert logits.shape == (BATCH, NUM_CLASSES), logits.shape
    assert jnp.all(jnp.isfinite(logits))
    print("KERNEL_OK")
</pallas_src>

<mosaic_0001>
module attributes {stable_mosaic.version = 11 : i64} {
  func.func @_trn_fused_kernel(%arg0: memref<64x768xf32, #tpu.memory_space<vmem>>, %arg1: memref<768x32xbf16, #tpu.memory_space<vmem>>, %arg2: memref<1x32xf32, #tpu.memory_space<vmem>>, %arg3: memref<256x512xbf16, #tpu.memory_space<vmem>>, %arg4: memref<1x512xf32, #tpu.memory_space<vmem>>, %arg5: memref<512x64xbf16, #tpu.memory_space<vmem>>, %arg6: memref<1x64xf32, #tpu.memory_space<vmem>>, %arg7: memref<64x128xbf16, #tpu.memory_space<vmem>>, %arg8: memref<1x128xf32, #tpu.memory_space<vmem>>, %arg9: memref<8x128xf32, #tpu.memory_space<vmem>>) attributes {dimension_semantics = [], scalar_prefetch = 0 : i64, scratch_operands = 0 : i64, tpu.core_type = #tpu.core_type<tc>} {
    %c0 = arith.constant 0 : index
    %c0_0 = arith.constant 0 : index
    %0 = vector.load %arg0[%c0, %c0_0] : memref<64x768xf32, #tpu.memory_space<vmem>>, vector<64x768xf32>
    %1 = arith.truncf %0 : vector<64x768xf32> to vector<64x768xbf16>
    %c0_1 = arith.constant 0 : index
    %c0_2 = arith.constant 0 : index
    %2 = vector.load %arg1[%c0_1, %c0_2] : memref<768x32xbf16, #tpu.memory_space<vmem>>, vector<768x32xbf16>
    %cst = arith.constant dense<0.000000e+00> : vector<64x32xf32>
    %3 = tpu.matmul %1, %2, %cst {dimension_numbers = #tpu.dot_dimension_numbers<[1], [0], [0], [1], [0, 0, 1, 1], [], []>} : vector<64x768xbf16>, vector<768x32xbf16>, vector<64x32xf32> -> vector<64x32xf32>
    %c0_3 = arith.constant 0 : index
    %c0_4 = arith.constant 0 : index
    %4 = vector.load %arg2[%c0_3, %c0_4] : memref<1x32xf32, #tpu.memory_space<vmem>>, vector<1x32xf32>
    %5 = vector.broadcast %4 : vector<1x32xf32> to vector<64x32xf32>
    %6 = arith.addf %3, %5 : vector<64x32xf32>
    %cst_5 = arith.constant 0.000000e+00 : f32
    %7 = vector.broadcast %cst_5 : f32 to vector<64x32xf32>
    %8 = arith.maximumf %6, %7 : vector<64x32xf32>
    %9 = arith.truncf %8 : vector<64x32xf32> to vector<64x32xbf16>
    %cst_6 = arith.constant 0.000000e+00 : f32
    %10 = vector.broadcast %cst_6 : f32 to vector<8x512xf32>
    %11 = vector.extract_strided_slice %9 {offsets = [0, 0], sizes = [8, 32], strides = [1, 1]} : vector<64x32xbf16> to vector<8x32xbf16>
    %c0_7 = arith.constant 0 : index
    %c0_8 = arith.constant 0 : index
    %12 = vector.load %arg3[%c0_7, %c0_8] : memref<256x512xbf16, #tpu.memory_space<vmem>>, vector<32x512xbf16>
    %cst_9 = arith.constant dense<0.000000e+00> : vector<8x512xf32>
    %13 = tpu.matmul %11, %12, %cst_9 {dimension_numbers = #tpu.dot_dimension_numbers<[1], [0], [0], [1], [0, 0, 1, 1], [], []>} : vector<8x32xbf16>, vector<32x512xbf16>, vector<8x512xf32> -> vector<8x512xf32>
    %14 = arith.addf %10, %13 : vector<8x512xf32>
    %15 = vector.extract_strided_slice %9 {offsets = [8, 0], sizes = [8, 32], strides = [1, 1]} : vector<64x32xbf16> to vector<8x32xbf16>
    %c32 = arith.constant 32 : index
    %c0_10 = arith.constant 0 : index
    %16 = vector.load %arg3[%c32, %c0_10] : memref<256x512xbf16, #tpu.memory_space<vmem>>, vector<32x512xbf16>
    %cst_11 = arith.constant dense<0.000000e+00> : vector<8x512xf32>
    %17 = tpu.matmul %15, %16, %cst_11 {dimension_numbers = #tpu.dot_dimension_numbers<[1], [0], [0], [1], [0, 0, 1, 1], [], []>} : vector<8x32xbf16>, vector<32x512xbf16>, vector<8x512xf32> -> vector<8x512xf32>
    %18 = arith.addf %14, %17 : vector<8x512xf32>
    %19 = vector.extract_strided_slice %9 {offsets = [16, 0], sizes = [8, 32], strides = [1, 1]} : vector<64x32xbf16> to vector<8x32xbf16>
    %c64 = arith.constant 64 : index
    %c0_12 = arith.constant 0 : index
    %20 = vector.load %arg3[%c64, %c0_12] : memref<256x512xbf16, #tpu.memory_space<vmem>>, vector<32x512xbf16>
    %cst_13 = arith.constant dense<0.000000e+00> : vector<8x512xf32>
    %21 = tpu.matmul %19, %20, %cst_13 {dimension_numbers = #tpu.dot_dimension_numbers<[1], [0], [0], [1], [0, 0, 1, 1], [], []>} : vector<8x32xbf16>, vector<32x512xbf16>, vector<8x512xf32> -> vector<8x512xf32>
    %22 = arith.addf %18, %21 : vector<8x512xf32>
    %23 = vector.extract_strided_slice %9 {offsets = [24, 0], sizes = [8, 32], strides = [1, 1]} : vector<64x32xbf16> to vector<8x32xbf16>
    %c96 = arith.constant 96 : index
    %c0_14 = arith.constant 0 : index
    %24 = vector.load %arg3[%c96, %c0_14] : memref<256x512xbf16, #tpu.memory_space<vmem>>, vector<32x512xbf16>
    %cst_15 = arith.constant dense<0.000000e+00> : vector<8x512xf32>
    %25 = tpu.matmul %23, %24, %cst_15 {dimension_numbers = #tpu.dot_dimension_numbers<[1], [0], [0], [1], [0, 0, 1, 1], [], []>} : vector<8x32xbf16>, vector<32x512xbf16>, vector<8x512xf32> -> vector<8x512xf32>
    %26 = arith.addf %22, %25 : vector<8x512xf32>
    %27 = vector.extract_strided_slice %9 {offsets = [32, 0], sizes = [8, 32], strides = [1, 1]} : vector<64x32xbf16> to vector<8x32xbf16>
    %c128 = arith.constant 128 : index
    %c0_16 = arith.constant 0 : index
    %28 = vector.load %arg3[%c128, %c0_16] : memref<256x512xbf16, #tpu.memory_space<vmem>>, vector<32x512xbf16>
    %cst_17 = arith.constant dense<0.000000e+00> : vector<8x512xf32>
    %29 = tpu.matmul %27, %28, %cst_17 {dimension_numbers = #tpu.dot_dimension_numbers<[1], [0], [0], [1], [0, 0, 1, 1], [], []>} : vector<8x32xbf16>, vector<32x512xbf16>, vector<8x512xf32> -> vector<8x512xf32>
    %30 = arith.addf %26, %29 : vector<8x512xf32>
    %31 = vector.extract_strided_slice %9 {offsets = [40, 0], sizes = [8, 32], strides = [1, 1]} : vector<64x32xbf16> to vector<8x32xbf16>
    %c160 = arith.constant 160 : index
    %c0_18 = arith.constant 0 : index
    %32 = vector.load %arg3[%c160, %c0_18] : memref<256x512xbf16, #tpu.memory_space<vmem>>, vector<32x512xbf16>
    %cst_19 = arith.constant dense<0.000000e+00> : vector<8x512xf32>
    %33 = tpu.matmul %31, %32, %cst_19 {dimension_numbers = #tpu.dot_dimension_numbers<[1], [0], [0], [1], [0, 0, 1, 1], [], []>} : vector<8x32xbf16>, vector<32x512xbf16>, vector<8x512xf32> -> vector<8x512xf32>
    %34 = arith.addf %30, %33 : vector<8x512xf32>
    %35 = vector.extract_strided_slice %9 {offsets = [48, 0], sizes = [8, 32], strides = [1, 1]} : vector<64x32xbf16> to vector<8x32xbf16>
    %c192 = arith.constant 192 : index
    %c0_20 = arith.constant 0 : index
    %36 = vector.load %arg3[%c192, %c0_20] : memref<256x512xbf16, #tpu.memory_space<vmem>>, vector<32x512xbf16>
    %cst_21 = arith.constant dense<0.000000e+00> : vector<8x512xf32>
    %37 = tpu.matmul %35, %36, %cst_21 {dimension_numbers = #tpu.dot_dimension_numbers<[1], [0], [0], [1], [0, 0, 1, 1], [], []>} : vector<8x32xbf16>, vector<32x512xbf16>, vector<8x512xf32> -> vector<8x512xf32>
    %38 = arith.addf %34, %37 : vector<8x512xf32>
    %39 = vector.extract_strided_slice %9 {offsets = [56, 0], sizes = [8, 32], strides = [1, 1]} : vector<64x32xbf16> to vector<8x32xbf16>
    %c224 = arith.constant 224 : index
    %c0_22 = arith.constant 0 : index
    %40 = vector.load %arg3[%c224, %c0_22] : memref<256x512xbf16, #tpu.memory_space<vmem>>, vector<32x512xbf16>
    %cst_23 = arith.constant dense<0.000000e+00> : vector<8x512xf32>
    %41 = tpu.matmul %39, %40, %cst_23 {dimension_numbers = #tpu.dot_dimension_numbers<[1], [0], [0], [1], [0, 0, 1, 1], [], []>} : vector<8x32xbf16>, vector<32x512xbf16>, vector<8x512xf32> -> vector<8x512xf32>
    %42 = arith.addf %38, %41 : vector<8x512xf32>
    %c0_24 = arith.constant 0 : index
    %c0_25 = arith.constant 0 : index
    %43 = vector.load %arg4[%c0_24, %c0_25] : memref<1x512xf32, #tpu.memory_space<vmem>>, vector<1x512xf32>
    %44 = vector.broadcast %43 : vector<1x512xf32> to vector<8x512xf32>
    %45 = arith.addf %42, %44 : vector<8x512xf32>
    %cst_26 = arith.constant 0.000000e+00 : f32
    %46 = vector.broadcast %cst_26 : f32 to vector<8x512xf32>
    %47 = arith.maximumf %45, %46 : vector<8x512xf32>
    %48 = arith.truncf %47 : vector<8x512xf32> to vector<8x512xbf16>
    %c0_27 = arith.constant 0 : index
    %c0_28 = arith.constant 0 : index
    %49 = vector.load %arg5[%c0_27, %c0_28] : memref<512x64xbf16, #tpu.memory_space<vmem>>, vector<512x64xbf16>
    %cst_29 = arith.constant dense<0.000000e+00> : vector<8x64xf32>
    %50 = tpu.matmul %48, %49, %cst_29 {dimension_numbers = #tpu.dot_dimension_numbers<[1], [0], [0], [1], [0, 0, 1, 1], [], []>} : vector<8x512xbf16>, vector<512x64xbf16>, vector<8x64xf32> -> vector<8x64xf32>
    %c0_30 = arith.constant 0 : index
    %c0_31 = arith.constant 0 : index
    %51 = vector.load %arg6[%c0_30, %c0_31] : memref<1x64xf32, #tpu.memory_space<vmem>>, vector<1x64xf32>
    %52 = vector.broadcast %51 : vector<1x64xf32> to vector<8x64xf32>
    %53 = arith.addf %50, %52 : vector<8x64xf32>
    %54 = arith.truncf %53 : vector<8x64xf32> to vector<8x64xbf16>
    %c0_32 = arith.constant 0 : index
    %c0_33 = arith.constant 0 : index
    %55 = vector.load %arg7[%c0_32, %c0_33] : memref<64x128xbf16, #tpu.memory_space<vmem>>, vector<64x128xbf16>
    %cst_34 = arith.constant dense<0.000000e+00> : vector<8x128xf32>
    %56 = tpu.matmul %54, %55, %cst_34 {dimension_numbers = #tpu.dot_dimension_numbers<[1], [0], [0], [1], [0, 0, 1, 1], [], []>} : vector<8x64xbf16>, vector<64x128xbf16>, vector<8x128xf32> -> vector<8x128xf32>
    %c0_35 = arith.constant 0 : index
    %c0_36 = arith.constant 0 : index
    %57 = vector.load %arg8[%c0_35, %c0_36] : memref<1x128xf32, #tpu.memory_space<vmem>>, vector<1x128xf32>
    %58 = vector.broadcast %57 : vector<1x128xf32> to vector<8x128xf32>
    %59 = arith.addf %56, %58 : vector<8x128xf32>
    %c0_37 = arith.constant 0 : index
    %c0_38 = arith.constant 0 : index
    %60 = vector.load %arg9[%c0_37, %c0_38] : memref<8x128xf32, #tpu.memory_space<vmem>>, vector<8x128xf32>
    tpu.vector_store %arg9[%c0_37, %c0_38], %59 {strides = array<i32>} : memref<8x128xf32, #tpu.memory_space<vmem>>, vector<8x128xf32>,
    return
  }
}

</mosaic_0001>

<llo_original>
// kernel: trn_forward.1
$region0: #{trn_forward.1}
  #allocation0 [shape = 'u32[]', space=smem, size = 0x4, offset = 0x4, fixed_abs, tag = 'smem constant byte address 0x4 - core index']
  #allocation1 [shape = 'u32[144,128]{1,0:T(1,128)}', space=vmem, size = 0x12000, scoped, tag = 'internal scratch']
  %s0 = inlined_call_operand.vmem [shape: f32[64,768], index: 0, kind: input, shape index: {}]
  %s1 = inlined_call_operand.vmem [shape: bf16[768,32], index: 1, kind: input, shape index: {}]
  %s2 = inlined_call_operand.vmem [shape: f32[1,32], index: 2, kind: input, shape index: {}]
  %s3 = inlined_call_operand.vmem [shape: bf16[256,512], index: 3, kind: input, shape index: {}]
  %s4 = inlined_call_operand.vmem [shape: f32[1,512], index: 4, kind: input, shape index: {}]
  %s5 = inlined_call_operand.vmem [shape: bf16[512,64], index: 5, kind: input, shape index: {}]
  %s6 = inlined_call_operand.vmem [shape: f32[1,64], index: 6, kind: input, shape index: {}]
  %s7 = inlined_call_operand.vmem [shape: bf16[64,128], index: 7, kind: input, shape index: {}]
  %s8 = inlined_call_operand.vmem [shape: f32[1,128], index: 8, kind: input, shape index: {}]
  %s9 = inlined_call_operand.vmem [shape: f32[8,128], index: 9, kind: output, shape index: {}]
  %s10 = sld [smem:[#allocation0]]
  $region46: #{trn_forward.1} parent=0
    _
  %s12 = ssub.s32 1, %s10
  %s13 = scalar_select 0, %s12, %s10
  // Predicated region
  $region2: #{trn_forward.1} parent=0 // pred_check
    _
  $region3: #{trn_forward.1} parent=0 // pred_check_branch
    %15 = sbr.rel (0) target = $region5
  $region4: #{trn_forward.1} parent=0 // pred_region
    _
  $region5: #{trn_forward.1} parent=0 // pred_fallthru
    _
  // Predicated region
  $region6: #{trn_forward.1} parent=0 // pred_check
    _
  $region7: #{trn_forward.1} parent=0 // pred_check_branch
    %17 = sbr.rel (0) target = $region9
  $region8: #{trn_forward.1} parent=0 // pred_region
    _
  $region9: #{trn_forward.1} parent=0 // pred_fallthru
    _
  // Predicated region
  $region10: #{trn_forward.1} parent=0 // pred_check
    _
  $region11: #{trn_forward.1} parent=0 // pred_check_branch
    %19 = sbr.rel (0) target = $region13
  $region12: #{trn_forward.1} parent=0 // pred_region
    _
  $region13: #{trn_forward.1} parent=0 // pred_fallthru
    _
  // Predicated region
  $region14: #{trn_forward.1} parent=0 // pred_check
    _
  $region15: #{trn_forward.1} parent=0 // pred_check_branch
    %21 = sbr.rel (0) target = $region17
  $region16: #{trn_forward.1} parent=0 // pred_region
    _
  $region17: #{trn_forward.1} parent=0 // pred_fallthru
    _
  // Predicated region
  $region18: #{trn_forward.1} parent=0 // pred_check
    _
  $region19: #{trn_forward.1} parent=0 // pred_check_branch
    %23 = sbr.rel (0) target = $region21
  $region20: #{trn_forward.1} parent=0 // pred_region
    _
  $region21: #{trn_forward.1} parent=0 // pred_fallthru
    _
  // Predicated region
  $region22: #{trn_forward.1} parent=0 // pred_check
    _
  $region23: #{trn_forward.1} parent=0 // pred_check_branch
    %25 = sbr.rel (0) target = $region25
  $region24: #{trn_forward.1} parent=0 // pred_region
    _
  $region25: #{trn_forward.1} parent=0 // pred_fallthru
    _
  // Predicated region
  $region26: #{trn_forward.1} parent=0 // pred_check
    _
  $region27: #{trn_forward.1} parent=0 // pred_check_branch
    %27 = sbr.rel (0) target = $region29
  $region28: #{trn_forward.1} parent=0 // pred_region
    _
  $region29: #{trn_forward.1} parent=0 // pred_fallthru
    _
  // Predicated region
  $region30: #{trn_forward.1} parent=0 // pred_check
    _
  $region31: #{trn_forward.1} parent=0 // pred_check_branch
    %29 = sbr.rel (0) target = $region33
  $region32: #{trn_forward.1} parent=0 // pred_region
    _
  $region33: #{trn_forward.1} parent=0 // pred_fallthru
    _
  // Predicated region
  $region34: #{trn_forward.1} parent=0 // pred_check
    _
  $region35: #{trn_forward.1} parent=0 // pred_check_branch
    %31 = sbr.rel (0) target = $region37
  $region36: #{trn_forward.1} parent=0 // pred_region
    _
  $region37: #{trn_forward.1} parent=0 // pred_fallthru
    _
  %v33 = vld [vmem:[%s0] sm:$0xff]
  %v34 = vld [vmem:[%s0 + $0x8] sm:$0xff]
  %v35 = vld [vmem:[%s0 + $0x10] sm:$0xff]
  %v36 = vld [vmem:[%s0 + $0x18] sm:$0xff]
  %v37 = vld [vmem:[%s0 + $0x20] sm:$0xff]
  %v38 = vld [vmem:[%s0 + $0x28] sm:$0xff]
  %v39 = vld [vmem:[%s0 + $0x30] sm:$0xff]
  %v40 = vld [vmem:[%s0 + $0x38] sm:$0xff]
  %v41 = vld [vmem:[%s0 + $0x40] sm:$0xff]
  %v42 = vld [vmem:[%s0 + $0x48] sm:$0xff]
  %v43 = vld [vmem:[%s0 + $0x50] sm:$0xff]
  %v44 = vld [vmem:[%s0 + $0x58] sm:$0xff]
  %v45 = vld [vmem:[%s0 + $0x60] sm:$0xff]
  %v46 = vld [vmem:[%s0 + $0x68] sm:$0xff]
  %v47 = vld [vmem:[%s0 + $0x70] sm:$0xff]
  %v48 = vld [vmem:[%s0 + $0x78] sm:$0xff]
  %v49 = vld [vmem:[%s0 + $0x80] sm:$0xff]
  %v50 = vld [vmem:[%s0 + $0x88] sm:$0xff]
  %v51 = vld [vmem:[%s0 + $0x90] sm:$0xff]
  %v52 = vld [vmem:[%s0 + $0x98] sm:$0xff]
  %v53 = vld [vmem:[%s0 + $0xa0] sm:$0xff]
  %v54 = vld [vmem:[%s0 + $0xa8] sm:$0xff]
  %v55 = vld [vmem:[%s0 + $0xb0] sm:$0xff]
  %v56 = vld [vmem:[%s0 + $0xb8] sm:$0xff]
  %v57 = vld [vmem:[%s0 + $0xc0] sm:$0xff]
  %v58 = vld [vmem:[%s0 + $0xc8] sm:$0xff]
  %v59 = vld [vmem:[%s0 + $0xd0] sm:$0xff]
  %v60 = vld [vmem:[%s0 + $0xd8] sm:$0xff]
  %v61 = vld [vmem:[%s0 + $0xe0] sm:$0xff]
  %v62 = vld [vmem:[%s0 + $0xe8] sm:$0xff]
  %v63 = vld [vmem:[%s0 + $0xf0] sm:$0xff]
  %v64 = vld [vmem:[%s0 + $0xf8] sm:$0xff]
  %v65 = vld [vmem:[%s0 + $0x100] sm:$0xff]
  %v66 = vld [vmem:[%s0 + $0x108] sm:$0xff]
  %v67 = vld [vmem:[%s0 + $0x110] sm:$0xff]
  %v68 = vld [vmem:[%s0 + $0x118] sm:$0xff]
  %v69 = vld [vmem:[%s0 + $0x120] sm:$0xff]
  %v70 = vld [vmem:[%s0 + $0x128] sm:$0xff]
  %v71 = vld [vmem:[%s0 + $0x130] sm:$0xff]
  %v72 = vld [vmem:[%s0 + $0x138] sm:$0xff]
  %v73 = vld [vmem:[%s0 + $0x140] sm:$0xff]
  %v74 = vld [vmem:[%s0 + $0x148] sm:$0xff]
  %v75 = vld [vmem:[%s0 + $0x150] sm:$0xff]
  %v76 = vld [vmem:[%s0 + $0x158] sm:$0xff]
  %v77 = vld [vmem:[%s0 + $0x160] sm:$0xff]
  %v78 = vld [vmem:[%s0 + $0x168] sm:$0xff]
  %v79 = vld [vmem:[%s0 + $0x170] sm:$0xff]
  %v80 = vld [vmem:[%s0 + $0x178] sm:$0xff]
  %v81 = vpack.c.bf16 %v39, %v33
  %v82 = vpack.c.bf16 %v40, %v34
  %v83 = vpack.c.bf16 %v41, %v35
  %v84 = vpack.c.bf16 %v42, %v36
  %v85 = vpack.c.bf16 %v43, %v37
  %v86 = vpack.c.bf16 %v44, %v38
  %v87 = vpack.c.bf16 %v51, %v45
  %v88 = vpack.c.bf16 %v52, %v46
  %v89 = vpack.c.bf16 %v53, %v47
  %v90 = vpack.c.bf16 %v54, %v48
  %v91 = vpack.c.bf16 %v55, %v49
  %v92 = vpack.c.bf16 %v56, %v50
  %v93 = vpack.c.bf16 %v63, %v57
  %v94 = vpack.c.bf16 %v64, %v58
  %v95 = vpack.c.bf16 %v65, %v59
  %v96 = vpack.c.bf16 %v66, %v60
  %v97 = vpack.c.bf16 %v67, %v61
  %v98 = vpack.c.bf16 %v68, %v62
  %v99 = vpack.c.bf16 %v75, %v69
  %v100 = vpack.c.bf16 %v76, %v70
  %v101 = vpack.c.bf16 %v77, %v71
  %v102 = vpack.c.bf16 %v78, %v72
  %v103 = vpack.c.bf16 %v79, %v73
  %v104 = vpack.c.bf16 %v80, %v74
  %v105 = vld [vmem:[%s1] sm:$0xf]
  %v106 = vld [vmem:[%s1 + $0x4] sm:$0xf]
  %v107 = vld [vmem:[%s1 + $0x8] sm:$0xf]
  %v108 = vld [vmem:[%s1 + $0xc] sm:$0xf]
  %v109 = vld [vmem:[%s1 + $0x10] sm:$0xf]
  %v110 = vld [vmem:[%s1 + $0x14] sm:$0xf]
  %v111 = vld [vmem:[%s1 + $0x18] sm:$0xf]
  %v112 = vld [vmem:[%s1 + $0x1c] sm:$0xf]
  %v113 = vld [vmem:[%s1 + $0x20] sm:$0xf]
  %v114 = vld [vmem:[%s1 + $0x24] sm:$0xf]
  %v115 = vld [vmem:[%s1 + $0x28] sm:$0xf]
  %v116 = vld [vmem:[%s1 + $0x2c] sm:$0xf]
  %v117 = vld [vmem:[%s1 + $0x30] sm:$0xf]
  %v118 = vld [vmem:[%s1 + $0x34] sm:$0xf]
  %v119 = vld [vmem:[%s1 + $0x38] sm:$0xf]
  %v120 = vld [vmem:[%s1 + $0x3c] sm:$0xf]
  %v121 = vld [vmem:[%s1 + $0x40] sm:$0xf]
  %v122 = vld [vmem:[%s1 + $0x44] sm:$0xf]
  %v123 = vld [vmem:[%s1 + $0x48] sm:$0xf]
  %v124 = vld [vmem:[%s1 + $0x4c] sm:$0xf]
  %v125 = vld [vmem:[%s1 + $0x50] sm:$0xf]
  %v126 = vld [vmem:[%s1 + $0x54] sm:$0xf]
  %v127 = vld [vmem:[%s1 + $0x58] sm:$0xf]
  %v128 = vld [vmem:[%s1 + $0x5c] sm:$0xf]
  %v129 = vld [vmem:[%s1 + $0x60] sm:$0xf]
  %v130 = vld [vmem:[%s1 + $0x64] sm:$0xf]
  %v131 = vld [vmem:[%s1 + $0x68] sm:$0xf]
  %v132 = vld [vmem:[%s1 + $0x6c] sm:$0xf]
  %v133 = vld [vmem:[%s1 + $0x70] sm:$0xf]
  %v134 = vld [vmem:[%s1 + $0x74] sm:$0xf]
  %v135 = vld [vmem:[%s1 + $0x78] sm:$0xf]
  %v136 = vld [vmem:[%s1 + $0x7c] sm:$0xf]
  %v137 = vld [vmem:[%s1 + $0x80] sm:$0xf]
  %v138 = vld [vmem:[%s1 + $0x84] sm:$0xf]
  %v139 = vld [vmem:[%s1 + $0x88] sm:$0xf]
  %v140 = vld [vmem:[%s1 + $0x8c] sm:$0xf]
  %v141 = vld [vmem:[%s1 + $0x90] sm:$0xf]
  %v142 = vld [vmem:[%s1 + $0x94] sm:$0xf]
  %v143 = vld [vmem:[%s1 + $0x98] sm:$0xf]
  %v144 = vld [vmem:[%s1 + $0x9c] sm:$0xf]
  %v145 = vld [vmem:[%s1 + $0xa0] sm:$0xf]
  %v146 = vld [vmem:[%s1 + $0xa4] sm:$0xf]
  %v147 = vld [vmem:[%s1 + $0xa8] sm:$0xf]
  %v148 = vld [vmem:[%s1 + $0xac] sm:$0xf]
  %v149 = vld [vmem:[%s1 + $0xb0] sm:$0xf]
  %v150 = vld [vmem:[%s1 + $0xb4] sm:$0xf]
  %v151 = vld [vmem:[%s1 + $0xb8] sm:$0xf]
  %v152 = vld [vmem:[%s1 + $0xbc] sm:$0xf]
  %v153 = vld [vmem:[%s1 + $0xc0] sm:$0xf]
  %v154 = vld [vmem:[%s1 + $0xc4] sm:$0xf]
  %v155 = vld [vmem:[%s1 + $0xc8] sm:$0xf]
  %v156 = vld [vmem:[%s1 + $0xcc] sm:$0xf]
  %v157 = vld [vmem:[%s1 + $0xd0] sm:$0xf]
  %v158 = vld [vmem:[%s1 + $0xd4] sm:$0xf]
  %v159 = vld [vmem:[%s1 + $0xd8] sm:$0xf]
  %v160 = vld [vmem:[%s1 + $0xdc] sm:$0xf]
  %v161 = vld [vmem:[%s1 + $0xe0] sm:$0xf]
  %v162 = vld [vmem:[%s1 + $0xe4] sm:$0xf]
  %v163 = vld [vmem:[%s1 + $0xe8] sm:$0xf]
  %v164 = vld [vmem:[%s1 + $0xec] sm:$0xf]
  %v165 = vld [vmem:[%s1 + $0xf0] sm:$0xf]
  %v166 = vld [vmem:[%s1 + $0xf4] sm:$0xf]
  %v167 = vld [vmem:[%s1 + $0xf8] sm:$0xf]
  %v168 = vld [vmem:[%s1 + $0xfc] sm:$0xf]
  %v169 = vld [vmem:[%s1 + $0x100] sm:$0xf]
  %v170 = vld [vmem:[%s1 + $0x104] sm:$0xf]
  %v171 = vld [vmem:[%s1 + $0x108] sm:$0xf]
  %v172 = vld [vmem:[%s1 + $0x10c] sm:$0xf]
  %v173 = vld [vmem:[%s1 + $0x110] sm:$0xf]
  %v174 = vld [vmem:[%s1 + $0x114] sm:$0xf]
  %v175 = vld [vmem:[%s1 + $0x118] sm:$0xf]
  %v176 = vld [vmem:[%s1 + $0x11c] sm:$0xf]
  %v177 = vld [vmem:[%s1 + $0x120] sm:$0xf]
  %v178 = vld [vmem:[%s1 + $0x124] sm:$0xf]
  %v179 = vld [vmem:[%s1 + $0x128] sm:$0xf]
  %v180 = vld [vmem:[%s1 + $0x12c] sm:$0xf]
  %v181 = vld [vmem:[%s1 + $0x130] sm:$0xf]
  %v182 = vld [vmem:[%s1 + $0x134] sm:$0xf]
  %v183 = vld [vmem:[%s1 + $0x138] sm:$0xf]
  %v184 = vld [vmem:[%s1 + $0x13c] sm:$0xf]
  %v185 = vld [vmem:[%s1 + $0x140] sm:$0xf]
  %v186 = vld [vmem:[%s1 + $0x144] sm:$0xf]
  %v187 = vld [vmem:[%s1 + $0x148] sm:$0xf]
  %v188 = vld [vmem:[%s1 + $0x14c] sm:$0xf]
  %v189 = vld [vmem:[%s1 + $0x150] sm:$0xf]
  %v190 = vld [vmem:[%s1 + $0x154] sm:$0xf]
  %v191 = vld [vmem:[%s1 + $0x158] sm:$0xf]
  %v192 = vld [vmem:[%s1 + $0x15c] sm:$0xf]
  %v193 = vld [vmem:[%s1 + $0x160] sm:$0xf]
  %v194 = vld [vmem:[%s1 + $0x164] sm:$0xf]
  %v195 = vld [vmem:[%s1 + $0x168] sm:$0xf]
  %v196 = vld [vmem:[%s1 + $0x16c] sm:$0xf]
  %v197 = vld [vmem:[%s1 + $0x170] sm:$0xf]
  %v198 = vld [vmem:[%s1 + $0x174] sm:$0xf]
  %v199 = vld [vmem:[%s1 + $0x178] sm:$0xf]
  %v200 = vld [vmem:[%s1 + $0x17c] sm:$0xf]
  %v201 = vld [vmem:[%s2] sm:$0x1]
  %v203 = vlaneseq
  %v204 = vshrl.u32 %v203, 7
  %v205 = vsub.s32 0, %v204
  %v206 = vrot.slane %v201, %v205
  %v304 = vunpack.c.l.b16 %v105
  %v305 = vunpack.c.l.b16 %v106
  %v306 = vunpack.c.l.b16 %v107
  %v307 = vunpack.c.l.b16 %v108
  %v308 = vunpack.c.l.b16 %v109
  %v309 = vunpack.c.l.b16 %v110
  %v310 = vunpack.c.l.b16 %v111
  %v311 = vunpack.c.l.b16 %v112
  %v312 = vunpack.c.l.b16 %v113
  %v313 = vunpack.c.l.b16 %v114
  %v314 = vunpack.c.l.b16 %v115
  %v315 = vunpack.c.l.b16 %v116
  %v316 = vunpack.c.l.b16 %v117
  %v317 = vunpack.c.l.b16 %v118
  %v318 = vunpack.c.l.b16 %v119
  %v319 = vunpack.c.l.b16 %v120
  %v320 = vunpack.c.l.b16 %v121
  %v321 = vunpack.c.l.b16 %v122
  %v322 = vunpack.c.l.b16 %v123
  %v323 = vunpack.c.l.b16 %v124
  %v324 = vunpack.c.l.b16 %v125
  %v325 = vunpack.c.l.b16 %v126
  %v326 = vunpack.c.l.b16 %v127
  %v327 = vunpack.c.l.b16 %v128
  %v328 = vunpack.c.l.b16 %v129
  %v329 = vunpack.c.l.b16 %v130
  %v330 = vunpack.c.l.b16 %v131
  %v331 = vunpack.c.l.b16 %v132
  %v332 = vunpack.c.l.b16 %v133
  %v333 = vunpack.c.l.b16 %v134
  %v334 = vunpack.c.l.b16 %v135
  %v335 = vunpack.c.l.b16 %v136
  %v336 = vunpack.c.l.b16 %v137
  %v337 = vunpack.c.l.b16 %v138
  %v338 = vunpack.c.l.b16 %v139
  %v339 = vunpack.c.l.b16 %v140
  %v340 = vunpack.c.l.b16 %v141
  %v341 = vunpack.c.l.b16 %v142
  %v342 = vunpack.c.l.b16 %v143
  %v343 = vunpack.c.l.b16 %v144
  %v344 = vunpack.c.l.b16 %v145
  %v345 = vunpack.c.l.b16 %v146
  %v346 = vunpack.c.l.b16 %v147
  %v347 = vunpack.c.l.b16 %v148
  %v348 = vunpack.c.l.b16 %v149
  %v349 = vunpack.c.l.b16 %v150
  %v350 = vunpack.c.l.b16 %v151
  %v351 = vunpack.c.l.b16 %v152
  %v352 = vunpack.c.l.b16 %v153
  %v353 = vunpack.c.l.b16 %v154
  %v354 = vunpack.c.l.b16 %v155
  %v355 = vunpack.c.l.b16 %v156
  %v356 = vunpack.c.l.b16 %v157
  %v357 = vunpack.c.l.b16 %v158
  %v358 = vunpack.c.l.b16 %v159
  %v359 = vunpack.c.l.b16 %v160
  %v360 = vunpack.c.l.b16 %v161
  %v361 = vunpack.c.l.b16 %v162
  %v362 = vunpack.c.l.b16 %v163
  %v363 = vunpack.c.l.b16 %v164
  %v364 = vunpack.c.l.b16 %v165
  %v365 = vunpack.c.l.b16 %v166
  %v366 = vunpack.c.l.b16 %v167
  %v367 = vunpack.c.l.b16 %v168
  %v368 = vunpack.c.l.b16 %v169
  %v369 = vunpack.c.l.b16 %v170
  %v370 = vunpack.c.l.b16 %v171
  %v371 = vunpack.c.l.b16 %v172
  %v372 = vunpack.c.l.b16 %v173
  %v373 = vunpack.c.l.b16 %v174
  %v374 = vunpack.c.l.b16 %v175
  %v375 = vunpack.c.l.b16 %v176
  %v376 = vunpack.c.l.b16 %v177
  %v377 = vunpack.c.l.b16 %v178
  %v378 = vunpack.c.l.b16 %v179
  %v379 = vunpack.c.l.b16 %v180
  %v380 = vunpack.c.l.b16 %v181
  %v381 = vunpack.c.l.b16 %v182
  %v382 = vunpack.c.l.b16 %v183
  %v383 = vunpack.c.l.b16 %v184
  %v384 = vunpack.c.l.b16 %v185
  %v385 = vunpack.c.l.b16 %v186
  %v386 = vunpack.c.l.b16 %v187
  %v387 = vunpack.c.l.b16 %v188
  %v388 = vunpack.c.l.b16 %v189
  %v389 = vunpack.c.l.b16 %v190
  %v390 = vunpack.c.l.b16 %v191
  %v391 = vunpack.c.l.b16 %v192
  %v392 = vunpack.c.l.b16 %v193
  %v393 = vunpack.c.l.b16 %v194
  %v394 = vunpack.c.l.b16 %v195
  %v395 = vunpack.c.l.b16 %v196
  %v396 = vunpack.c.l.b16 %v197
  %v397 = vunpack.c.l.b16 %v198
  %v398 = vunpack.c.l.b16 %v199
  %v399 = vunpack.c.l.b16 %v200
  %v400 = vpack.c.b16 %v305, %v304
  %v401 = vpack.c.b16 %v307, %v306
  %v402 = vpack.c.b16 %v309, %v308
  %v403 = vpack.c.b16 %v311, %v310
  %v404 = vpack.c.b16 %v313, %v312
  %v405 = vpack.c.b16 %v315, %v314
  %v406 = vpack.c.b16 %v317, %v316
  %v407 = vpack.c.b16 %v319, %v318
  %v408 = vpack.c.b16 %v321, %v320
  %v409 = vpack.c.b16 %v323, %v322
  %v410 = vpack.c.b16 %v325, %v324
  %v411 = vpack.c.b16 %v327, %v326
  %v412 = vpack.c.b16 %v329, %v328
  %v413 = vpack.c.b16 %v331, %v330
  %v414 = vpack.c.b16 %v333, %v332
  %v415 = vpack.c.b16 %v335, %v334
  %v416 = vpack.c.b16 %v337, %v336
  %v417 = vpack.c.b16 %v339, %v338
  %v418 = vpack.c.b16 %v341, %v340
  %v419 = vpack.c.b16 %v343, %v342
  %v420 = vpack.c.b16 %v345, %v344
  %v421 = vpack.c.b16 %v347, %v346
  %v422 = vpack.c.b16 %v349, %v348
  %v423 = vpack.c.b16 %v351, %v350
  %v424 = vpack.c.b16 %v353, %v352
  %v425 = vpack.c.b16 %v355, %v354
  %v426 = vpack.c.b16 %v357, %v356
  %v427 = vpack.c.b16 %v359, %v358
  %v428 = vpack.c.b16 %v361, %v360
  %v429 = vpack.c.b16 %v363, %v362
  %v430 = vpack.c.b16 %v365, %v364
  %v431 = vpack.c.b16 %v367, %v366
  %v432 = vpack.c.b16 %v369, %v368
  %v433 = vpack.c.b16 %v371, %v370
  %v434 = vpack.c.b16 %v373, %v372
  %v435 = vpack.c.b16 %v375, %v374
  %v436 = vpack.c.b16 %v377, %v376
  %v437 = vpack.c.b16 %v379, %v378
  %v438 = vpack.c.b16 %v381, %v380
  %v439 = vpack.c.b16 %v383, %v382
  %v440 = vpack.c.b16 %v385, %v384
  %v441 = vpack.c.b16 %v387, %v386
  %v442 = vpack.c.b16 %v389, %v388
  %v443 = vpack.c.b16 %v391, %v390
  %v444 = vpack.c.b16 %v393, %v392
  %v445 = vpack.c.b16 %v395, %v394
  %v446 = vpack.c.b16 %v397, %v396
  %v447 = vpack.c.b16 %v399, %v398
  %496 = vmatprep.subr.bf16.mxu0 0
  %497 = vmatpush1.bf16.msra.mxu0 %v400
  %498 = vmatprep.subr.bf16.mxu0 0
  %499 = vmatpush1.bf16.msra.mxu0 %v401
  %500 = vmatprep.subr.bf16.mxu0 0
  %501 = vmatpush1.bf16.msra.mxu0 %v402
  %502 = vmatprep.subr.bf16.mxu0 0
  %503 = vmatpush1.bf16.msra.mxu0 %v403
  %504 = vmatprep.subr.bf16.mxu0 0
  %505 = vmatpush1.bf16.msra.mxu0 %v404
  %506 = vmatprep.subr.bf16.mxu0 0
  %507 = vmatpush1.bf16.msra.mxu0 %v405
  %508 = vmatprep.subr.bf16.mxu0 0
  %509 = vmatpush1.bf16.msra.mxu0 %v406
  %510 = vmatprep.subr.bf16.mxu0 0
  %511 = vmatpush1.bf16.msra.mxu0 %v407
  %512 = vmatprep.subr.bf16.mxu0 0
  %513 = vmatpush1.bf16.msra.mxu0 %v408
  %514 = vmatprep.subr.bf16.mxu0 0
  %515 = vmatpush1.bf16.msra.mxu0 %v409
  %516 = vmatprep.subr.bf16.mxu0 0
  %517 = vmatpush1.bf16.msra.mxu0 %v410
  %518 = vmatprep.subr.bf16.mxu0 0
  %519 = vmatpush1.bf16.msra.mxu0 %v411
  %520 = vmatprep.subr.bf16.mxu0 0
  %521 = vmatpush1.bf16.msra.mxu0 %v412
  %522 = vmatprep.subr.bf16.mxu0 0
  %523 = vmatpush1.bf16.msra.mxu0 %v413
  %524 = vmatprep.subr.bf16.mxu0 0
  %525 = vmatpush1.bf16.msra.mxu0 %v414
  %526 = vmatprep.subr.bf16.mxu0 0
  %527 = vmatpush1.bf16.msra.mxu0 %v415
  %528 = vmatprep.mubr.bf16.mxu0 %v82
  %529 = vmatmul.mubr.bf16.gmra.mrb[0].mxu0 %v81
  %v530 = vpop.f32.mrb[0].mxu0
  %v531 = vadd.f32 %v206, %v530
  %v532 = vpop.f32.mrb[0].mxu0
  %v533 = vpop.f32.mrb[0].mxu0
  %v534 = vadd.f32 %v206, %v533
  %v535 = vpop.f32.mrb[0].mxu0
  %536 = vmatprep.mubr.bf16.mxu0 %v88
  %537 = vmatmul.mubr.bf16.gmra.mrb[0].mxu0 %v87
  %v538 = vpop.f32.mrb[0].mxu0
  %v539 = vadd.f32 %v206, %v538
  %v540 = vpop.f32.mrb[0].mxu0
  %v541 = vpop.f32.mrb[0].mxu0
  %v542 = vadd.f32 %v206, %v541
  %v543 = vpop.f32.mrb[0].mxu0
  %544 = vmatprep.mubr.bf16.mxu0 %v94
  %545 = vmatmul.mubr.bf16.gmra.mrb[0].mxu0 %v93
  %v546 = vpop.f32.mrb[0].mxu0
  %v547 = vadd.f32 %v206, %v546
  %v548 = vpop.f32.mrb[0].mxu0
  %v549 = vpop.f32.mrb[0].mxu0
  %v550 = vadd.f32 %v206, %v549
  %v551 = vpop.f32.mrb[0].mxu0
  %552 = vmatprep.mubr.bf16.mxu0 %v100
  %553 = vmatmul.mubr.bf16.gmra.mrb[0].mxu0 %v99
  %v554 = vpop.f32.mrb[0].mxu0
  %v555 = vadd.f32 %v206, %v554
  %v556 = vpop.f32.mrb[0].mxu0
  %v557 = vpop.f32.mrb[0].mxu0
  %v558 = vadd.f32 %v206, %v557
  %v559 = vpop.f32.mrb[0].mxu0
  %560 = vdwg.mxu0
  %561 = vmatprep.subr.bf16.mxu0 0
  %562 = vmatpush1.bf16.msra.mxu0 %v416
  %563 = vmatprep.subr.bf16.mxu0 0
  %564 = vmatpush1.bf16.msra.mxu0 %v417
  %565 = vmatprep.subr.bf16.mxu0 0
  %566 = vmatpush1.bf16.msra.mxu0 %v418
  %567 = vmatprep.subr.bf16.mxu0 0
  %568 = vmatpush1.bf16.msra.mxu0 %v419
  %569 = vmatprep.subr.bf16.mxu0 0
  %570 = vmatpush1.bf16.msra.mxu0 %v420
  %571 = vmatprep.subr.bf16.mxu0 0
  %572 = vmatpush1.bf16.msra.mxu0 %v421
  %573 = vmatprep.subr.bf16.mxu0 0
  %574 = vmatpush1.bf16.msra.mxu0 %v422
  %575 = vmatprep.subr.bf16.mxu0 0
  %576 = vmatpush1.bf16.msra.mxu0 %v423
  %577 = vmatprep.subr.bf16.mxu0 0
  %578 = vmatpush1.bf16.msra.mxu0 %v424
  %579 = vmatprep.subr.bf16.mxu0 0
  %580 = vmatpush1.bf16.msra.mxu0 %v425
  %581 = vmatprep.subr.bf16.mxu0 0
  %582 = vmatpush1.bf16.msra.mxu0 %v426
  %583 = vmatprep.subr.bf16.mxu0 0
  %584 = vmatpush1.bf16.msra.mxu0 %v427
  %585 = vmatprep.subr.bf16.mxu0 0
  %586 = vmatpush1.bf16.msra.mxu0 %v428
  %587 = vmatprep.subr.bf16.mxu0 0
  %588 = vmatpush1.bf16.msra.mxu0 %v429
  %589 = vmatprep.subr.bf16.mxu0 0
  %590 = vmatpush1.bf16.msra.mxu0 %v430
  %591 = vmatprep.subr.bf16.mxu0 0
  %592 = vmatpush1.bf16.msra.mxu0 %v431
  %593 = vmatprep.mubr.bf16.mxu0 %v84
  %594 = vmatmul.mubr.bf16.gmra.mrb[0].mxu0 %v83
  %v595 = vpop.f32.mrb[0].mxu0
  %v596 = vadd.f32 %v531, %v595
  %v597 = vpop.f32.mrb[0].mxu0
  %v598 = vpop.f32.mrb[0].mxu0
  %v599 = vadd.f32 %v534, %v598
  %v600 = vpop.f32.mrb[0].mxu0
  %601 = vmatprep.mubr.bf16.mxu0 %v90
  %602 = vmatmul.mubr.bf16.gmra.mrb[0].mxu0 %v89
  %v603 = vpop.f32.mrb[0].mxu0
  %v604 = vadd.f32 %v539, %v603
  %v605 = vpop.f32.mrb[0].mxu0
  %v606 = vpop.f32.mrb[0].mxu0
  %v607 = vadd.f32 %v542, %v606
  %v608 = vpop.f32.mrb[0].mxu0
  %609 = vmatprep.mubr.bf16.mxu0 %v96
  %610 = vmatmul.mubr.bf16.gmra.mrb[0].mxu0 %v95
  %v611 = vpop.f32.mrb[0].mxu0
  %v612 = vadd.f32 %v547, %v611
  %v613 = vpop.f32.mrb[0].mxu0
  %v614 = vpop.f32.mrb[0].mxu0
  %v615 = vadd.f32 %v550, %v614
  %v616 = vpop.f32.mrb[0].mxu0
  %617 = vmatprep.mubr.bf16.mxu0 %v102
  %618 = vmatmul.mubr.bf16.gmra.mrb[0].mxu0 %v101
  %v619 = vpop.f32.mrb[0].mxu0
  %v620 = vadd.f32 %v555, %v619
  %v621 = vpop.f32.mrb[0].mxu0
  %v622 = vpop.f32.mrb[0].mxu0
  %v623 = vadd.f32 %v558, %v622
  %v624 = vpop.f32.mrb[0].mxu0
  %625 = vdwg.mxu0
  %626 = vmatprep.subr.bf16.mxu0 0
  %627 = vmatpush1.bf16.msra.mxu0 %v432
  %628 = vmatprep.subr.bf16.mxu0 0
  %629 = vmatpush1.bf16.msra.mxu0 %v433
  %630 = vmatprep.subr.bf16.mxu0 0
  %631 = vmatpush1.bf16.msra.mxu0 %v434
  %632 = vmatprep.subr.bf16.mxu0 0
  %633 = vmatpush1.bf16.msra.mxu0 %v435
  %634 = vmatprep.subr.bf16.mxu0 0
  %635 = vmatpush1.bf16.msra.mxu0 %v436
  %636 = vmatprep.subr.bf16.mxu0 0
  %637 = vmatpush1.bf16.msra.mxu0 %v437
  %638 = vmatprep.subr.bf16.mxu0 0
  %639 = vmatpush1.bf16.msra.mxu0 %v438
  %640 = vmatprep.subr.bf16.mxu0 0
  %641 = vmatpush1.bf16.msra.mxu0 %v439
  %642 = vmatprep.subr.bf16.mxu0 0
  %643 = vmatpush1.bf16.msra.mxu0 %v440
  %644 = vmatprep.subr.bf16.mxu0 0
  %645 = vmatpush1.bf16.msra.mxu0 %v441
  %646 = vmatprep.subr.bf16.mxu0 0
  %647 = vmatpush1.bf16.msra.mxu0 %v442
  %648 = vmatprep.subr.bf16.mxu0 0
  %649 = vmatpush1.bf16.msra.mxu0 %v443
  %650 = vmatprep.subr.bf16.mxu0 0
  %651 = vmatpush1.bf16.msra.mxu0 %v444
  %652 = vmatprep.subr.bf16.mxu0 0
  %653 = vmatpush1.bf16.msra.mxu0 %v445
  %654 = vmatprep.subr.bf16.mxu0 0
  %655 = vmatpush1.bf16.msra.mxu0 %v446
  %656 = vmatprep.subr.bf16.mxu0 0
  %657 = vmatpush1.bf16.msra.mxu0 %v447
  %658 = vmatprep.mubr.bf16.mxu0 %v86
  %659 = vmatmul.mubr.bf16.gmra.mrb[0].mxu0 %v85
  %v660 = vpop.f32.mrb[0].mxu0
  %v661 = vadd.f32 %v596, %v660
  %v662 = vpop.f32.mrb[0].mxu0
  %v663 = vpop.f32.mrb[0].mxu0
  %v664 = vadd.f32 %v599, %v663
  %v665 = vpop.f32.mrb[0].mxu0
  %666 = vmatprep.mubr.bf16.mxu0 %v92
  %667 = vmatmul.mubr.bf16.gmra.mrb[0].mxu0 %v91
  %v668 = vpop.f32.mrb[0].mxu0
  %v669 = vadd.f32 %v604, %v668
  %v670 = vpop.f32.mrb[0].mxu0
  %v671 = vpop.f32.mrb[0].mxu0
  %v672 = vadd.f32 %v607, %v671
  %v673 = vpop.f32.mrb[0].mxu0
  %674 = vmatprep.mubr.bf16.mxu0 %v98
  %675 = vmatmul.mubr.bf16.gmra.mrb[0].mxu0 %v97
  %v676 = vpop.f32.mrb[0].mxu0
  %v677 = vadd.f32 %v612, %v676
  %v678 = vpop.f32.mrb[0].mxu0
  %v679 = vpop.f32.mrb[0].mxu0
  %v680 = vadd.f32 %v615, %v679
  %v681 = vpop.f32.mrb[0].mxu0
  %682 = vmatprep.mubr.bf16.mxu0 %v104
  %683 = vmatmul.mubr.bf16.gmra.mrb[0].mxu0 %v103
  %v684 = vpop.f32.mrb[0].mxu0
  %v685 = vadd.f32 %v620, %v684
  %v686 = vpop.f32.mrb[0].mxu0
  %v687 = vpop.f32.mrb[0].mxu0
  %v688 = vadd.f32 %v623, %v687
  %v689 = vpop.f32.mrb[0].mxu0
  %690 = vdwg.mxu0
  %v691 = vmax.f32 %v661, 0.0
  %v692 = vmax.f32 %v664, 0.0
  %v693 = vmax.f32 %v669, 0.0
  %v694 = vmax.f32 %v672, 0.0
  %v695 = vmax.f32 %v677, 0.0
  %v696 = vmax.f32 %v680, 0.0
  %v697 = vmax.f32 %v685, 0.0
  %v698 = vmax.f32 %v688, 0.0
  %v699 = vpack.c.bf16 %v692, %v691
  %v700 = vpack.c.bf16 %v694, %v693
  %v701 = vpack.c.bf16 %v696, %v695
  %v702 = vpack.c.bf16 %v698, %v697
  %v703 = vld [vmem:[%s3] sm:$0xff]
  %v704 = vld [vmem:[%s3 + $0x8] sm:$0xff]
  %v705 = vld [vmem:[%s3 + $0x10] sm:$0xff]
  %v706 = vld [vmem:[%s3 + $0x18] sm:$0xff]
  %v707 = vld [vmem:[%s3 + $0x20] sm:$0xff]
  %v708 = vld [vmem:[%s3 + $0x28] sm:$0xff]
  %v709 = vld [vmem:[%s3 + $0x30] sm:$0xff]
  %v710 = vld [vmem:[%s3 + $0x38] sm:$0xff]
  %v711 = vld [vmem:[%s3 + $0x40] sm:$0xff]
  %v712 = vld [vmem:[%s3 + $0x48] sm:$0xff]
  %v713 = vld [vmem:[%s3 + $0x50] sm:$0xff]
  %v714 = vld [vmem:[%s3 + $0x58] sm:$0xff]
  %v715 = vld [vmem:[%s3 + $0x60] sm:$0xff]
  %v716 = vld [vmem:[%s3 + $0x68] sm:$0xff]
  %v717 = vld [vmem:[%s3 + $0x70] sm:$0xff]
  %v718 = vld [vmem:[%s3 + $0x78] sm:$0xff]
  %v720 = vrot.slane %v699, 4
  %v729 = vunpack.c.l.b16 %v711
  %v730 = vunpack.c.h.b16 %v711
  %v731 = vunpack.c.l.b16 %v712
  %v732 = vunpack.c.h.b16 %v712
  %v733 = vunpack.c.l.b16 %v713
  %v734 = vunpack.c.h.b16 %v713
  %v735 = vunpack.c.l.b16 %v714
  %v736 = vunpack.c.h.b16 %v714
  %v737 = vunpack.c.l.b16 %v715
  %v738 = vunpack.c.h.b16 %v715
  %v739 = vunpack.c.l.b16 %v716
  %v740 = vunpack.c.h.b16 %v716
  %v741 = vunpack.c.l.b16 %v717
  %v742 = vunpack.c.h.b16 %v717
  %v743 = vunpack.c.l.b16 %v718
  %v744 = vunpack.c.h.b16 %v718
  %v745 = vpack.c.b16 %v733, %v729
  %v746 = vpack.c.b16 %v734, %v730
  %v747 = vpack.c.b16 %v735, %v731
  %v748 = vpack.c.b16 %v736, %v732
  %v749 = vpack.c.b16 %v741, %v737
  %v750 = vpack.c.b16 %v742, %v738
  %v751 = vpack.c.b16 %v743, %v739
  %v752 = vpack.c.b16 %v744, %v740
  %vm761 = vcmask 261120
  %v763 = vsel %vm761, %v720, 0
  %765 = vmatprep.subr.bf16.mxu0 %v746
  %766 = vmatpush1.bf16.msra.mxu0 %v745
  %767 = vmatprep.subr.bf16.mxu0 %v750
  %768 = vmatpush1.bf16.msra.mxu0 %v749
  %769 = vmatprep.subr.bf16.mxu0 0
  %770 = vmatpush1.bf16.msra.mxu0 0
  %771 = vmatprep.subr.bf16.mxu0 0
  %772 = vmatpush1.bf16.msra.mxu0 0
  %773 = vmatprep.subr.bf16.mxu0 0
  %774 = vmatpush1.bf16.msra.mxu0 0
  %775 = vmatprep.subr.bf16.mxu0 0
  %776 = vmatpush1.bf16.msra.mxu0 0
  %777 = vmatprep.subr.bf16.mxu0 0
  %778 = vmatpush1.bf16.msra.mxu0 0
  %779 = vmatprep.subr.bf16.mxu0 0
  %780 = vmatpush1.bf16.msra.mxu0 0
  %781 = vmatprep.subr.bf16.mxu0 0
  %782 = vmatpush1.bf16.msra.mxu0 0
  %783 = vmatprep.subr.bf16.mxu0 0
  %784 = vmatpush1.bf16.msra.mxu0 0
  %785 = vmatprep.subr.bf16.mxu0 0
  %786 = vmatpush1.bf16.msra.mxu0 0
  %787 = vmatprep.subr.bf16.mxu0 0
  %788 = vmatpush1.bf16.msra.mxu0 0
  %789 = vmatprep.subr.bf16.mxu0 0
  %790 = vmatpush1.bf16.msra.mxu0 0
  %791 = vmatprep.subr.bf16.mxu0 0
  %792 = vmatpush1.bf16.msra.mxu0 0
  %793 = vmatprep.subr.bf16.mxu0 0
  %794 = vmatpush1.bf16.msra.mxu0 0
  %795 = vmatprep.subr.bf16.mxu0 0
  %796 = vmatpush1.bf16.msra.mxu0 0
  %797 = vmatprep.mubr.bf16.mxu0 0
  %798 = vmatmul.mubr.bf16.gmra.mrb[0].mxu0 %v763
  %v799 = vpop.f32.mrb[0].mxu0
  %v800 = vadd.f32 0.0, %v799
  %v801 = vpop.f32.mrb[0].mxu0
  %v802 = vadd.f32 0.0, %v801
  %v803 = vpop.f32.mrb[0].mxu0
  %v804 = vpop.f32.mrb[0].mxu0
  %805 = vdwg.mxu0
  %806 = vmatprep.subr.bf16.mxu0 %v748
  %807 = vmatpush1.bf16.msra.mxu0 %v747
  %808 = vmatprep.subr.bf16.mxu0 %v752
  %809 = vmatpush1.bf16.msra.mxu0 %v751
  %810 = vmatprep.subr.bf16.mxu0 0
  %811 = vmatpush1.bf16.msra.mxu0 0
  %812 = vmatprep.subr.bf16.mxu0 0
  %813 = vmatpush1.bf16.msra.mxu0 0
  %814 = vmatprep.subr.bf16.mxu0 0
  %815 = vmatpush1.bf16.msra.mxu0 0
  %816 = vmatprep.subr.bf16.mxu0 0
  %817 = vmatpush1.bf16.msra.mxu0 0
  %818 = vmatprep.subr.bf16.mxu0 0
  %819 = vmatpush1.bf16.msra.mxu0 0
  %820 = vmatprep.subr.bf16.mxu0 0
  %821 = vmatpush1.bf16.msra.mxu0 0
  %822 = vmatprep.subr.bf16.mxu0 0
  %823 = vmatpush1.bf16.msra.mxu0 0
  %824 = vmatprep.subr.bf16.mxu0 0
  %825 = vmatpush1.bf16.msra.mxu0 0
  %826 = vmatprep.subr.bf16.mxu0 0
  %827 = vmatpush1.bf16.msra.mxu0 0
  %828 = vmatprep.subr.bf16.mxu0 0
  %829 = vmatpush1.bf16.msra.mxu0 0
  %830 = vmatprep.subr.bf16.mxu0 0
  %831 = vmatpush1.bf16.msra.mxu0 0
  %832 = vmatprep.subr.bf16.mxu0 0
  %833 = vmatpush1.bf16.msra.mxu0 0
  %834 = vmatprep.subr.bf16.mxu0 0
  %835 = vmatpush1.bf16.msra.mxu0 0
  %836 = vmatprep.subr.bf16.mxu0 0
  %837 = vmatpush1.bf16.msra.mxu0 0
  %838 = vmatprep.mubr.bf16.mxu0 0
  %839 = vmatmul.mubr.bf16.gmra.mrb[0].mxu0 %v763
  %v840 = vpop.f32.mrb[0].mxu0
  %v841 = vadd.f32 0.0, %v840
  %v842 = vpop.f32.mrb[0].mxu0
  %v843 = vadd.f32 0.0, %v842
  %v844 = vpop.f32.mrb[0].mxu0
  %v845 = vpop.f32.mrb[0].mxu0
  %846 = vdwg.mxu0
  %v855 = vunpack.c.l.b16 %v703
  %v856 = vunpack.c.h.b16 %v703
  %v857 = vunpack.c.l.b16 %v704
  %v858 = vunpack.c.h.b16 %v704
  %v859 = vunpack.c.l.b16 %v705
  %v860 = vunpack.c.h.b16 %v705
  %v861 = vunpack.c.l.b16 %v706
  %v862 = vunpack.c.h.b16 %v706
  %v863 = vunpack.c.l.b16 %v707
  %v864 = vunpack.c.h.b16 %v707
  %v865 = vunpack.c.l.b16 %v708
  %v866 = vunpack.c.h.b16 %v708
  %v867 = vunpack.c.l.b16 %v709
  %v868 = vunpack.c.h.b16 %v709
  %v869 = vunpack.c.l.b16 %v710
  %v870 = vunpack.c.h.b16 %v710
  %v871 = vpack.c.b16 %v859, %v855
  %v872 = vpack.c.b16 %v860, %v856
  %v873 = vpack.c.b16 %v861, %v857
  %v874 = vpack.c.b16 %v862, %v858
  %v875 = vpack.c.b16 %v867, %v863
  %v876 = vpack.c.b16 %v868, %v864
  %v877 = vpack.c.b16 %v869, %v865
  %v878 = vpack.c.b16 %v870, %v866
  %v888 = vsel %vm761, %v699, 0
  %890 = vmatprep.subr.bf16.mxu0 %v872
  %891 = vmatpush1.bf16.msra.mxu0 %v871
  %892 = vmatprep.subr.bf16.mxu0 %v876
  %893 = vmatpush1.bf16.msra.mxu0 %v875
  %894 = vmatprep.subr.bf16.mxu0 0
  %895 = vmatpush1.bf16.msra.mxu0 0
  %896 = vmatprep.subr.bf16.mxu0 0
  %897 = vmatpush1.bf16.msra.mxu0 0
  %898 = vmatprep.subr.bf16.mxu0 0
  %899 = vmatpush1.bf16.msra.mxu0 0
  %900 = vmatprep.subr.bf16.mxu0 0
  %901 = vmatpush1.bf16.msra.mxu0 0
  %902 = vmatprep.subr.bf16.mxu0 0
  %903 = vmatpush1.bf16.msra.mxu0 0
  %904 = vmatprep.subr.bf16.mxu0 0
  %905 = vmatpush1.bf16.msra.mxu0 0
  %906 = vmatprep.subr.bf16.mxu0 0
  %907 = vmatpush1.bf16.msra.mxu0 0
  %908 = vmatprep.subr.bf16.mxu0 0
  %909 = vmatpush1.bf16.msra.mxu0 0
  %910 = vmatprep.subr.bf16.mxu0 0
  %911 = vmatpush1.bf16.msra.mxu0 0
  %912 = vmatprep.subr.bf16.mxu0 0
  %913 = vmatpush1.bf16.msra.mxu0 0
  %914 = vmatprep.subr.bf16.mxu0 0
  %915 = vmatpush1.bf16.msra.mxu0 0
  %916 = vmatprep.subr.bf16.mxu0 0
  %917 = vmatpush1.bf16.msra.mxu0 0
  %918 = vmatprep.subr.bf16.mxu0 0
  %919 = vmatpush1.bf16.msra.mxu0 0
  %920 = vmatprep.subr.bf16.mxu0 0
  %921 = vmatpush1.bf16.msra.mxu0 0
  %922 = vmatprep.mubr.bf16.mxu0 0
  %923 = vmatmul.mubr.bf16.gmra.mrb[0].mxu0 %v888
  %v924 = vpop.f32.mrb[0].mxu0
  %v925 = vadd.f32 %v800, %v924
  %v926 = vpop.f32.mrb[0].mxu0
  %v927 = vadd.f32 %v802, %v926
  %v928 = vpop.f32.mrb[0].mxu0
  %v929 = vpop.f32.mrb[0].mxu0
  %930 = vdwg.mxu0
  %931 = vmatprep.subr.bf16.mxu0 %v874
  %932 = vmatpush1.bf16.msra.mxu0 %v873
  %933 = vmatprep.subr.bf16.mxu0 %v878
  %934 = vmatpush1.bf16.msra.mxu0 %v877
  %935 = vmatprep.subr.bf16.mxu0 0
  %936 = vmatpush1.bf16.msra.mxu0 0
  %937 = vmatprep.subr.bf16.mxu0 0
  %938 = vmatpush1.bf16.msra.mxu0 0
  %939 = vmatprep.subr.bf16.mxu0 0
  %940 = vmatpush1.bf16.msra.mxu0 0
  %941 = vmatprep.subr.bf16.mxu0 0
  %942 = vmatpush1.bf16.msra.mxu0 0
  %943 = vmatprep.subr.bf16.mxu0 0
  %944 = vmatpush1.bf16.msra.mxu0 0
  %945 = vmatprep.subr.bf16.mxu0 0
  %946 = vmatpush1.bf16.msra.mxu0 0
  %947 = vmatprep.subr.bf16.mxu0 0
  %948 = vmatpush1.bf16.msra.mxu0 0
  %949 = vmatprep.subr.bf16.mxu0 0
  %950 = vmatpush1.bf16.msra.mxu0 0
  %951 = vmatprep.subr.bf16.mxu0 0
  %952 = vmatpush1.bf16.msra.mxu0 0
  %953 = vmatprep.subr.bf16.mxu0 0
  %954 = vmatpush1.bf16.msra.mxu0 0
  %955 = vmatprep.subr.bf16.mxu0 0
  %956 = vmatpush1.bf16.msra.mxu0 0
  %957 = vmatprep.subr.bf16.mxu0 0
  %958 = vmatpush1.bf16.msra.mxu0 0
  %959 = vmatprep.subr.bf16.mxu0 0
  %960 = vmatpush1.bf16.msra.mxu0 0
  %961 = vmatprep.subr.bf16.mxu0 0
  %962 = vmatpush1.bf16.msra.mxu0 0
  %963 = vmatprep.mubr.bf16.mxu0 0
  %964 = vmatmul.mubr.bf16.gmra.mrb[0].mxu0 %v888
  %v965 = vpop.f32.mrb[0].mxu0
  %v966 = vadd.f32 %v841, %v965
  %v967 = vpop.f32.mrb[0].mxu0
  %v968 = vadd.f32 %v843, %v967
  %v969 = vpop.f32.mrb[0].mxu0
  %v970 = vpop.f32.mrb[0].mxu0
  %971 = vdwg.mxu0
  %v972 = vld [vmem:[%s3 + $0x80] sm:$0xff]
  %v973 = vld [vmem:[%s3 + $0x88] sm:$0xff]
  %v974 = vld [vmem:[%s3 + $0x90] sm:$0xff]
  %v975 = vld [vmem:[%s3 + $0x98] sm:$0xff]
  %v976 = vld [vmem:[%s3 + $0xa0] sm:$0xff]
  %v977 = vld [vmem:[%s3 + $0xa8] sm:$0xff]
  %v978 = vld [vmem:[%s3 + $0xb0] sm:$0xff]
  %v979 = vld [vmem:[%s3 + $0xb8] sm:$0xff]
  %v988 = vunpack.c.l.b16 %v972
  %v989 = vunpack.c.h.b16 %v972
  %v990 = vunpack.c.l.b16 %v973
  %v991 = vunpack.c.h.b16 %v973
  %v992 = vunpack.c.l.b16 %v974
  %v993 = vunpack.c.h.b16 %v974
  %v994 = vunpack.c.l.b16 %v975
  %v995 = vunpack.c.h.b16 %v975
  %v996 = vunpack.c.l.b16 %v976
  %v997 = vunpack.c.h.b16 %v976
  %v998 = vunpack.c.l.b16 %v977
  %v999 = vunpack.c.h.b16 %v977
  %v1000 = vunpack.c.l.b16 %v978
  %v1001 = vunpack.c.h.b16 %v978
  %v1002 = vunpack.c.l.b16 %v979
  %v1003 = vunpack.c.h.b16 %v979
  %v1004 = vpack.c.b16 %v992, %v988
  %v1005 = vpack.c.b16 %v993, %v989
  %v1006 = vpack.c.b16 %v994, %v990
  %v1007 = vpack.c.b16 %v995, %v991
  %v1008 = vpack.c.b16 %v1000, %v996
  %v1009 = vpack.c.b16 %v1001, %v997
  %v1010 = vpack.c.b16 %v1002, %v998
  %v1011 = vpack.c.b16 %v1003, %v999
  %v1021 = vsel %vm761, %v700, 0
  %1023 = vmatprep.subr.bf16.mxu0 %v1005
  %1024 = vmatpush1.bf16.msra.mxu0 %v1004
  %1025 = vmatprep.subr.bf16.mxu0 %v1009
  %1026 = vmatpush1.bf16.msra.mxu0 %v1008
  %1027 = vmatprep.subr.bf16.mxu0 0
  %1028 = vmatpush1.bf16.msra.mxu0 0
  %1029 = vmatprep.subr.bf16.mxu0 0
  %1030 = vmatpush1.bf16.msra.mxu0 0
  %1031 = vmatprep.subr.bf16.mxu0 0
  %1032 = vmatpush1.bf16.msra.mxu0 0
  %1033 = vmatprep.subr.bf16.mxu0 0
  %1034 = vmatpush1.bf16.msra.mxu0 0
  %1035 = vmatprep.subr.bf16.mxu0 0
  %1036 = vmatpush1.bf16.msra.mxu0 0
  %1037 = vmatprep.subr.bf16.mxu0 0
  %1038 = vmatpush1.bf16.msra.mxu0 0
  %1039 = vmatprep.subr.bf16.mxu0 0
  %1040 = vmatpush1.bf16.msra.mxu0 0
  %1041 = vmatprep.subr.bf16.mxu0 0
  %1042 = vmatpush1.bf16.msra.mxu0 0
  %1043 = vmatprep.subr.bf16.mxu0 0
  %1044 = vmatpush1.bf16.msra.mxu0 0
  %1045 = vmatprep.subr.bf16.mxu0 0
  %1046 = vmatpush1.bf16.msra.mxu0 0
  %1047 = vmatprep.subr.bf16.mxu0 0
  %1048 = vmatpush1.bf16.msra.mxu0 0
  %1049 = vmatprep.subr.bf16.mxu0 0
  %1050 = vmatpush1.bf16.msra.mxu0 0
  %1051 = vmatprep.subr.bf16.mxu0 0
  %1052 = vmatpush1.bf16.msra.mxu0 0
  %1053 = vmatprep.subr.bf16.mxu0 0
  %1054 = vmatpush1.bf16.msra.mxu0 0
  %1055 = vmatprep.mubr.bf16.mxu0 0
  %1056 = vmatmul.mubr.bf16.gmra.mrb[0].mxu0 %v1021
  %v1057 = vpop.f32.mrb[0].mxu0
  %v1058 = vadd.f32 0.0, %v1057
  %v1059 = vpop.f32.mrb[0].mxu0
  %v1060 = vadd.f32 0.0, %v1059
  %v1061 = vpop.f32.mrb[0].mxu0
  %v1062 = vpop.f32.mrb[0].mxu0
  %1063 = vdwg.mxu0
  %1064 = vmatprep.subr.bf16.mxu0 %v1007
  %1065 = vmatpush1.bf16.msra.mxu0 %v1006
  %1066 = vmatprep.subr.bf16.mxu0 %v1011
  %1067 = vmatpush1.bf16.msra.mxu0 %v1010
  %1068 = vmatprep.subr.bf16.mxu0 0
  %1069 = vmatpush1.bf16.msra.mxu0 0
  %1070 = vmatprep.subr.bf16.mxu0 0
  %1071 = vmatpush1.bf16.msra.mxu0 0
  %1072 = vmatprep.subr.bf16.mxu0 0
  %1073 = vmatpush1.bf16.msra.mxu0 0
  %1074 = vmatprep.subr.bf16.mxu0 0
  %1075 = vmatpush1.bf16.msra.mxu0 0
  %1076 = vmatprep.subr.bf16.mxu0 0
  %1077 = vmatpush1.bf16.msra.mxu0 0
  %1078 = vmatprep.subr.bf16.mxu0 0
  %1079 = vmatpush1.bf16.msra.mxu0 0
  %1080 = vmatprep.subr.bf16.mxu0 0
  %1081 = vmatpush1.bf16.msra.mxu0 0
  %1082 = vmatprep.subr.bf16.mxu0 0
  %1083 = vmatpush1.bf16.msra.mxu0 0
  %1084 = vmatprep.subr.bf16.mxu0 0
  %1085 = vmatpush1.bf16.msra.mxu0 0
  %1086 = vmatprep.subr.bf16.mxu0 0
  %1087 = vmatpush1.bf16.msra.mxu0 0
  %1088 = vmatprep.subr.bf16.mxu0 0
  %1089 = vmatpush1.bf16.msra.mxu0 0
  %1090 = vmatprep.subr.bf16.mxu0 0
  %1091 = vmatpush1.bf16.msra.mxu0 0
  %1092 = vmatprep.subr.bf16.mxu0 0
  %1093 = vmatpush1.bf16.msra.mxu0 0
  %1094 = vmatprep.subr.bf16.mxu0 0
  %1095 = vmatpush1.bf16.msra.mxu0 0
  %1096 = vmatprep.mubr.bf16.mxu0 0
  %1097 = vmatmul.mubr.bf16.gmra.mrb[0].mxu0 %v1021
  %v1098 = vpop.f32.mrb[0].mxu0
  %v1099 = vadd.f32 0.0, %v1098
  %v1100 = vpop.f32.mrb[0].mxu0
  %v1101 = vadd.f32 0.0, %v1100
  %v1102 = vpop.f32.mrb[0].mxu0
  %v1103 = vpop.f32.mrb[0].mxu0
  %1104 = vdwg.mxu0
  %v1105 = vadd.f32 %v925, %v1058
  %v1106 = vadd.f32 %v927, %v1060
  %v1107 = vadd.f32 %v966, %v1099
  %v1108 = vadd.f32 %v968, %v1101
  %v1109 = vld [vmem:[%s3 + $0xc0] sm:$0xff]
  %v1110 = vld [vmem:[%s3 + $0xc8] sm:$0xff]
  %v1111 = vld [vmem:[%s3 + $0xd0] sm:$0xff]
  %v1112 = vld [vmem:[%s3 + $0xd8] sm:$0xff]
  %v1113 = vld [vmem:[%s3 + $0xe0] sm:$0xff]
  %v1114 = vld [vmem:[%s3 + $0xe8] sm:$0xff]
  %v1115 = vld [vmem:[%s3 + $0xf0] sm:$0xff]
  %v1116 = vld [vmem:[%s3 + $0xf8] sm:$0xff]
  %v1118 = vrot.slane %v700, 4
  %v1127 = vunpack.c.l.b16 %v1109
  %v1128 = vunpack.c.h.b16 %v1109
  %v1129 = vunpack.c.l.b16 %v1110
  %v1130 = vunpack.c.h.b16 %v1110
  %v1131 = vunpack.c.l.b16 %v1111
  %v1132 = vunpack.c.h.b16 %v1111
  %v1133 = vunpack.c.l.b16 %v1112
  %v1134 = vunpack.c.h.b16 %v1112
  %v1135 = vunpack.c.l.b16 %v1113
  %v1136 = vunpack.c.h.b16 %v1113
  %v1137 = vunpack.c.l.b16 %v1114
  %v1138 = vunpack.c.h.b16 %v1114
  %v1139 = vunpack.c.l.b16 %v1115
  %v1140 = vunpack.c.h.b16 %v1115
  %v1141 = vunpack.c.l.b16 %v1116
  %v1142 = vunpack.c.h.b16 %v1116
  %v1143 = vpack.c.b16 %v1131, %v1127
  %v1144 = vpack.c.b16 %v1132, %v1128
  %v1145 = vpack.c.b16 %v1133, %v1129
  %v1146 = vpack.c.b16 %v1134, %v1130
  %v1147 = vpack.c.b16 %v1139, %v1135
  %v1148 = vpack.c.b16 %v1140, %v1136
  %v1149 = vpack.c.b16 %v1141, %v1137
  %v1150 = vpack.c.b16 %v1142, %v1138
  %v1160 = vsel %vm761, %v1118, 0
  %1162 = vmatprep.subr.bf16.mxu0 %v1144
  %1163 = vmatpush1.bf16.msra.mxu0 %v1143
  %1164 = vmatprep.subr.bf16.mxu0 %v1148
  %1165 = vmatpush1.bf16.msra.mxu0 %v1147
  %1166 = vmatprep.subr.bf16.mxu0 0
  %1167 = vmatpush1.bf16.msra.mxu0 0
  %1168 = vmatprep.subr.bf16.mxu0 0
  %1169 = vmatpush1.bf16.msra.mxu0 0
  %1170 = vmatprep.subr.bf16.mxu0 0
  %1171 = vmatpush1.bf16.msra.mxu0 0
  %1172 = vmatprep.subr.bf16.mxu0 0
  %1173 = vmatpush1.bf16.msra.mxu0 0
  %1174 = vmatprep.subr.bf16.mxu0 0
  %1175 = vmatpush1.bf16.msra.mxu0 0
  %1176 = vmatprep.subr.bf16.mxu0 0
  %1177 = vmatpush1.bf16.msra.mxu0 0
  %1178 = vmatprep.subr.bf16.mxu0 0
  %1179 = vmatpush1.bf16.msra.mxu0 0
  %1180 = vmatprep.subr.bf16.mxu0 0
  %1181 = vmatpush1.bf16.msra.mxu0 0
  %1182 = vmatprep.subr.bf16.mxu0 0
  %1183 = vmatpush1.bf16.msra.mxu0 0
  %1184 = vmatprep.subr.bf16.mxu0 0
  %1185 = vmatpush1.bf16.msra.mxu0 0
  %1186 = vmatprep.subr.bf16.mxu0 0
  %1187 = vmatpush1.bf16.msra.mxu0 0
  %1188 = vmatprep.subr.bf16.mxu0 0
  %1189 = vmatpush1.bf16.msra.mxu0 0
  %1190 = vmatprep.subr.bf16.mxu0 0
  %1191 = vmatpush1.bf16.msra.mxu0 0
  %1192 = vmatprep.subr.bf16.mxu0 0
  %1193 = vmatpush1.bf16.msra.mxu0 0
  %1194 = vmatprep.mubr.bf16.mxu0 0
  %1195 = vmatmul.mubr.bf16.gmra.mrb[0].mxu0 %v1160
  %v1196 = vpop.f32.mrb[0].mxu0
  %v1197 = vadd.f32 0.0, %v1196
  %v1198 = vpop.f32.mrb[0].mxu0
  %v1199 = vadd.f32 0.0, %v1198
  %v1200 = vpop.f32.mrb[0].mxu0
  %v1201 = vpop.f32.mrb[0].mxu0
  %1202 = vdwg.mxu0
  %1203 = vmatprep.subr.bf16.mxu0 %v1146
  %1204 = vmatpush1.bf16.msra.mxu0 %v1145
  %1205 = vmatprep.subr.bf16.mxu0 %v1150
  %1206 = vmatpush1.bf16.msra.mxu0 %v1149
  %1207 = vmatprep.subr.bf16.mxu0 0
  %1208 = vmatpush1.bf16.msra.mxu0 0
  %1209 = vmatprep.subr.bf16.mxu0 0
  %1210 = vmatpush1.bf16.msra.mxu0 0
  %1211 = vmatprep.subr.bf16.mxu0 0
  %1212 = vmatpush1.bf16.msra.mxu0 0
  %1213 = vmatprep.subr.bf16.mxu0 0
  %1214 = vmatpush1.bf16.msra.mxu0 0
  %1215 = vmatprep.subr.bf16.mxu0 0
  %1216 = vmatpush1.bf16.msra.mxu0 0
  %1217 = vmatprep.subr.bf16.mxu0 0
  %1218 = vmatpush1.bf16.msra.mxu0 0
  %1219 = vmatprep.subr.bf16.mxu0 0
  %1220 = vmatpush1.bf16.msra.mxu0 0
  %1221 = vmatprep.subr.bf16.mxu0 0
  %1222 = vmatpush1.bf16.msra.mxu0 0
  %1223 = vmatprep.subr.bf16.mxu0 0
  %1224 = vmatpush1.bf16.msra.mxu0 0
  %1225 = vmatprep.subr.bf16.mxu0 0
  %1226 = vmatpush1.bf16.msra.mxu0 0
  %1227 = vmatprep.subr.bf16.mxu0 0
  %1228 = vmatpush1.bf16.msra.mxu0 0
  %1229 = vmatprep.subr.bf16.mxu0 0
  %1230 = vmatpush1.bf16.msra.mxu0 0
  %1231 = vmatprep.subr.bf16.mxu0 0
  %1232 = vmatpush1.bf16.msra.mxu0 0
  %1233 = vmatprep.subr.bf16.mxu0 0
  %1234 = vmatpush1.bf16.msra.mxu0 0
  %1235 = vmatprep.mubr.bf16.mxu0 0
  %1236 = vmatmul.mubr.bf16.gmra.mrb[0].mxu0 %v1160
  %v1237 = vpop.f32.mrb[0].mxu0
  %v1238 = vadd.f32 0.0, %v1237
  %v1239 = vpop.f32.mrb[0].mxu0
  %v1240 = vadd.f32 0.0, %v1239
  %v1241 = vpop.f32.mrb[0].mxu0
  %v1242 = vpop.f32.mrb[0].mxu0
  %1243 = vdwg.mxu0
  %v1244 = vadd.f32 %v1105, %v1197
  %v1245 = vadd.f32 %v1106, %v1199
  %v1246 = vadd.f32 %v1107, %v1238
  %v1247 = vadd.f32 %v1108, %v1240
  %v1248 = vld [vmem:[%s3 + $0x100] sm:$0xff]
  %v1249 = vld [vmem:[%s3 + $0x108] sm:$0xff]
  %v1250 = vld [vmem:[%s3 + $0x110] sm:$0xff]
  %v1251 = vld [vmem:[%s3 + $0x118] sm:$0xff]
  %v1252 = vld [vmem:[%s3 + $0x120] sm:$0xff]
  %v1253 = vld [vmem:[%s3 + $0x128] sm:$0xff]
  %v1254 = vld [vmem:[%s3 + $0x130] sm:$0xff]
  %v1255 = vld [vmem:[%s3 + $0x138] sm:$0xff]
  %v1264 = vunpack.c.l.b16 %v1248
  %v1265 = vunpack.c.h.b16 %v1248
  %v1266 = vunpack.c.l.b16 %v1249
  %v1267 = vunpack.c.h.b16 %v1249
  %v1268 = vunpack.c.l.b16 %v1250
  %v1269 = vunpack.c.h.b16 %v1250
  %v1270 = vunpack.c.l.b16 %v1251
  %v1271 = vunpack.c.h.b16 %v1251
  %v1272 = vunpack.c.l.b16 %v1252
  %v1273 = vunpack.c.h.b16 %v1252
  %v1274 = vunpack.c.l.b16 %v1253
  %v1275 = vunpack.c.h.b16 %v1253
  %v1276 = vunpack.c.l.b16 %v1254
  %v1277 = vunpack.c.h.b16 %v1254
  %v1278 = vunpack.c.l.b16 %v1255
  %v1279 = vunpack.c.h.b16 %v1255
  %v1280 = vpack.c.b16 %v1268, %v1264
  %v1281 = vpack.c.b16 %v1269, %v1265
  %v1282 = vpack.c.b16 %v1270, %v1266
  %v1283 = vpack.c.b16 %v1271, %v1267
  %v1284 = vpack.c.b16 %v1276, %v1272
  %v1285 = vpack.c.b16 %v1277, %v1273
  %v1286 = vpack.c.b16 %v1278, %v1274
  %v1287 = vpack.c.b16 %v1279, %v1275
  %v1297 = vsel %vm761, %v701, 0
  %1299 = vmatprep.subr.bf16.mxu0 %v1281
  %1300 = vmatpush1.bf16.msra.mxu0 %v1280
  %1301 = vmatprep.subr.bf16.mxu0 %v1285
  %1302 = vmatpush1.bf16.msra.mxu0 %v1284
  %1303 = vmatprep.subr.bf16.mxu0 0
  %1304 = vmatpush1.bf16.msra.mxu0 0
  %1305 = vmatprep.subr.bf16.mxu0 0
  %1306 = vmatpush1.bf16.msra.mxu0 0
  %1307 = vmatprep.subr.bf16.mxu0 0
  %1308 = vmatpush1.bf16.msra.mxu0 0
  %1309 = vmatprep.subr.bf16.mxu0 0
  %1310 = vmatpush1.bf16.msra.mxu0 0
  %1311 = vmatprep.subr.bf16.mxu0 0
  %1312 = vmatpush1.bf16.msra.mxu0 0
  %1313 = vmatprep.subr.bf16.mxu0 0
  %1314 = vmatpush1.bf16.msra.mxu0 0
  %1315 = vmatprep.subr.bf16.mxu0 0
  %1316 = vmatpush1.bf16.msra.mxu0 0
  %1317 = vmatprep.subr.bf16.mxu0 0
  %1318 = vmatpush1.bf16.msra.mxu0 0
  %1319 = vmatprep.subr.bf16.mxu0 0
  %1320 = vmatpush1.bf16.msra.mxu0 0
  %1321 = vmatprep.subr.bf16.mxu0 0
  %1322 = vmatpush1.bf16.msra.mxu0 0
  %1323 = vmatprep.subr.bf16.mxu0 0
  %1324 = vmatpush1.bf16.msra.mxu0 0
  %1325 = vmatprep.subr.bf16.mxu0 0
  %1326 = vmatpush1.bf16.msra.mxu0 0
  %1327 = vmatprep.subr.bf16.mxu0 0
  %1328 = vmatpush1.bf16.msra.mxu0 0
  %1329 = vmatprep.subr.bf16.mxu0 0
  %1330 = vmatpush1.bf16.msra.mxu0 0
  %1331 = vmatprep.mubr.bf16.mxu0 0
  %1332 = vmatmul.mubr.bf16.gmra.mrb[0].mxu0 %v1297
  %v1333 = vpop.f32.mrb[0].mxu0
  %v1334 = vadd.f32 0.0, %v1333
  %v1335 = vpop.f32.mrb[0].mxu0
  %v1336 = vadd.f32 0.0, %v1335
  %v1337 = vpop.f32.mrb[0].mxu0
  %v1338 = vpop.f32.mrb[0].mxu0
  %1339 = vdwg.mxu0
  %1340 = vmatprep.subr.bf16.mxu0 %v1283
  %1341 = vmatpush1.bf16.msra.mxu0 %v1282
  %1342 = vmatprep.subr.bf16.mxu0 %v1287
  %1343 = vmatpush1.bf16.msra.mxu0 %v1286
  %1344 = vmatprep.subr.bf16.mxu0 0
  %1345 = vmatpush1.bf16.msra.mxu0 0
  %1346 = vmatprep.subr.bf16.mxu0 0
  %1347 = vmatpush1.bf16.msra.mxu0 0
  %1348 = vmatprep.subr.bf16.mxu0 0
  %1349 = vmatpush1.bf16.msra.mxu0 0
  %1350 = vmatprep.subr.bf16.mxu0 0
  %1351 = vmatpush1.bf16.msra.mxu0 0
  %1352 = vmatprep.subr.bf16.mxu0 0
  %1353 = vmatpush1.bf16.msra.mxu0 0
  %1354 = vmatprep.subr.bf16.mxu0 0
  %1355 = vmatpush1.bf16.msra.mxu0 0
  %1356 = vmatprep.subr.bf16.mxu0 0
  %1357 = vmatpush1.bf16.msra.mxu0 0
  %1358 = vmatprep.subr.bf16.mxu0 0
  %1359 = vmatpush1.bf16.msra.mxu0 0
  %1360 = vmatprep.subr.bf16.mxu0 0
  %1361 = vmatpush1.bf16.msra.mxu0 0
  %1362 = vmatprep.subr.bf16.mxu0 0
  %1363 = vmatpush1.bf16.msra.mxu0 0
  %1364 = vmatprep.subr.bf16.mxu0 0
  %1365 = vmatpush1.bf16.msra.mxu0 0
  %1366 = vmatprep.subr.bf16.mxu0 0
  %1367 = vmatpush1.bf16.msra.mxu0 0
  %1368 = vmatprep.subr.bf16.mxu0 0
  %1369 = vmatpush1.bf16.msra.mxu0 0
  %1370 = vmatprep.subr.bf16.mxu0 0
  %1371 = vmatpush1.bf16.msra.mxu0 0
  %1372 = vmatprep.mubr.bf16.mxu0 0
  %1373 = vmatmul.mubr.bf16.gmra.mrb[0].mxu0 %v1297
  %v1374 = vpop.f32.mrb[0].mxu0
  %v1375 = vadd.f32 0.0, %v1374
  %v1376 = vpop.f32.mrb[0].mxu0
  %v1377 = vadd.f32 0.0, %v1376
  %v1378 = vpop.f32.mrb[0].mxu0
  %v1379 = vpop.f32.mrb[0].mxu0
  %1380 = vdwg.mxu0
  %v1381 = vadd.f32 %v1244, %v1334
  %v1382 = vadd.f32 %v1245, %v1336
  %v1383 = vadd.f32 %v1246, %v1375
  %v1384 = vadd.f32 %v1247, %v1377
  %v1385 = vld [vmem:[%s3 + $0x140] sm:$0xff]
  %v1386 = vld [vmem:[%s3 + $0x148] sm:$0xff]
  %v1387 = vld [vmem:[%s3 + $0x150] sm:$0xff]
  %v1388 = vld [vmem:[%s3 + $0x158] sm:$0xff]
  %v1389 = vld [vmem:[%s3 + $0x160] sm:$0xff]
  %v1390 = vld [vmem:[%s3 + $0x168] sm:$0xff]
  %v1391 = vld [vmem:[%s3 + $0x170] sm:$0xff]
  %v1392 = vld [vmem:[%s3 + $0x178] sm:$0xff]
  %v1394 = vrot.slane %v701, 4
  %v1403 = vunpack.c.l.b16 %v1385
  %v1404 = vunpack.c.h.b16 %v1385
  %v1405 = vunpack.c.l.b16 %v1386
  %v1406 = vunpack.c.h.b16 %v1386
  %v1407 = vunpack.c.l.b16 %v1387
  %v1408 = vunpack.c.h.b16 %v1387
  %v1409 = vunpack.c.l.b16 %v1388
  %v1410 = vunpack.c.h.b16 %v1388
  %v1411 = vunpack.c.l.b16 %v1389
  %v1412 = vunpack.c.h.b16 %v1389
  %v1413 = vunpack.c.l.b16 %v1390
  %v1414 = vunpack.c.h.b16 %v1390
  %v1415 = vunpack.c.l.b16 %v1391
  %v1416 = vunpack.c.h.b16 %v1391
  %v1417 = vunpack.c.l.b16 %v1392
  %v1418 = vunpack.c.h.b16 %v1392
  %v1419 = vpack.c.b16 %v1407, %v1403
  %v1420 = vpack.c.b16 %v1408, %v1404
  %v1421 = vpack.c.b16 %v1409, %v1405
  %v1422 = vpack.c.b16 %v1410, %v1406
  %v1423 = vpack.c.b16 %v1415, %v1411
  %v1424 = vpack.c.b16 %v1416, %v1412
  %v1425 = vpack.c.b16 %v1417, %v1413
  %v1426 = vpack.c.b16 %v1418, %v1414
  %v1436 = vsel %vm761, %v1394, 0
  %1438 = vmatprep.subr.bf16.mxu0 %v1420
  %1439 = vmatpush1.bf16.msra.mxu0 %v1419
  %1440 = vmatprep.subr.bf16.mxu0 %v1424
  %1441 = vmatpush1.bf16.msra.mxu0 %v1423
  %1442 = vmatprep.subr.bf16.mxu0 0
  %1443 = vmatpush1.bf16.msra.mxu0 0
  %1444 = vmatprep.subr.bf16.mxu0 0
  %1445 = vmatpush1.bf16.msra.mxu0 0
  %1446 = vmatprep.subr.bf16.mxu0 0
  %1447 = vmatpush1.bf16.msra.mxu0 0
  %1448 = vmatprep.subr.bf16.mxu0 0
  %1449 = vmatpush1.bf16.msra.mxu0 0
  %1450 = vmatprep.subr.bf16.mxu0 0
  %1451 = vmatpush1.bf16.msra.mxu0 0
  %1452 = vmatprep.subr.bf16.mxu0 0
  %1453 = vmatpush1.bf16.msra.mxu0 0
  %1454 = vmatprep.subr.bf16.mxu0 0
  %1455 = vmatpush1.bf16.msra.mxu0 0
  %1456 = vmatprep.subr.bf16.mxu0 0
  %1457 = vmatpush1.bf16.msra.mxu0 0
  %1458 = vmatprep.subr.bf16.mxu0 0
  %1459 = vmatpush1.bf16.msra.mxu0 0
  %1460 = vmatprep.subr.bf16.mxu0 0
  %1461 = vmatpush1.bf16.msra.mxu0 0
  %1462 = vmatprep.subr.bf16.mxu0 0
  %1463 = vmatpush1.bf16.msra.mxu0 0
  %1464 = vmatprep.subr.bf16.mxu0 0
  %1465 = vmatpush1.bf16.msra.mxu0 0
  %1466 = vmatprep.subr.bf16.mxu0 0
  %1467 = vmatpush1.bf16.msra.mxu0 0
  %1468 = vmatprep.subr.bf16.mxu0 0
  %1469 = vmatpush1.bf16.msra.mxu0 0
  %1470 = vmatprep.mubr.bf16.mxu0 0
  %1471 = vmatmul.mubr.bf16.gmra.mrb[0].mxu0 %v1436
  %v1472 = vpop.f32.mrb[0].mxu0
  %v1473 = vadd.f32 0.0, %v1472
  %v1474 = vpop.f32.mrb[0].mxu0
  %v1475 = vadd.f32 0.0, %v1474
  %v1476 = vpop.f32.mrb[0].mxu0
  %v1477 = vpop.f32.mrb[0].mxu0
  %1478 = vdwg.mxu0
  %1479 = vmatprep.subr.bf16.mxu0 %v1422
  %1480 = vmatpush1.bf16.msra.mxu0 %v1421
  %1481 = vmatprep.subr.bf16.mxu0 %v1426
  %1482 = vmatpush1.bf16.msra.mxu0 %v1425
  %1483 = vmatprep.subr.bf16.mxu0 0
  %1484 = vmatpush1.bf16.msra.mxu0 0
  %1485 = vmatprep.subr.bf16.mxu0 0
  %1486 = vmatpush1.bf16.msra.mxu0 0
  %1487 = vmatprep.subr.bf16.mxu0 0
  %1488 = vmatpush1.bf16.msra.mxu0 0
  %1489 = vmatprep.subr.bf16.mxu0 0
  %1490 = vmatpush1.bf16.msra.mxu0 0
  %1491 = vmatprep.subr.bf16.mxu0 0
  %1492 = vmatpush1.bf16.msra.mxu0 0
  %1493 = vmatprep.subr.bf16.mxu0 0
  %1494 = vmatpush1.bf16.msra.mxu0 0
  %1495 = vmatprep.subr.bf16.mxu0 0
  %1496 = vmatpush1.bf16.msra.mxu0 0
  %1497 = vmatprep.subr.bf16.mxu0 0
  %1498 = vmatpush1.bf16.msra.mxu0 0
  %1499 = vmatprep.subr.bf16.mxu0 0
  %1500 = vmatpush1.bf16.msra.mxu0 0
  %1501 = vmatprep.subr.bf16.mxu0 0
  %1502 = vmatpush1.bf16.msra.mxu0 0
  %1503 = vmatprep.subr.bf16.mxu0 0
  %1504 = vmatpush1.bf16.msra.mxu0 0
  %1505 = vmatprep.subr.bf16.mxu0 0
  %1506 = vmatpush1.bf16.msra.mxu0 0
  %1507 = vmatprep.subr.bf16.mxu0 0
  %1508 = vmatpush1.bf16.msra.mxu0 0
  %1509 = vmatprep.subr.bf16.mxu0 0
  %1510 = vmatpush1.bf16.msra.mxu0 0
  %1511 = vmatprep.mubr.bf16.mxu0 0
  %1512 = vmatmul.mubr.bf16.gmra.mrb[0].mxu0 %v1436
  %v1513 = vpop.f32.mrb[0].mxu0
  %v1514 = vadd.f32 0.0, %v1513
  %v1515 = vpop.f32.mrb[0].mxu0
  %v1516 = vadd.f32 0.0, %v1515
  %v1517 = vpop.f32.mrb[0].mxu0
  %v1518 = vpop.f32.mrb[0].mxu0
  %1519 = vdwg.mxu0
  %v1520 = vadd.f32 %v1381, %v1473
  %v1521 = vadd.f32 %v1382, %v1475
  %v1522 = vadd.f32 %v1383, %v1514
  %v1523 = vadd.f32 %v1384, %v1516
  %v1524 = vld [vmem:[%s3 + $0x180] sm:$0xff]
  %v1525 = vld [vmem:[%s3 + $0x188] sm:$0xff]
  %v1526 = vld [vmem:[%s3 + $0x190] sm:$0xff]
  %v1527 = vld [vmem:[%s3 + $0x198] sm:$0xff]
  %v1528 = vld [vmem:[%s3 + $0x1a0] sm:$0xff]
  %v1529 = vld [vmem:[%s3 + $0x1a8] sm:$0xff]
  %v1530 = vld [vmem:[%s3 + $0x1b0] sm:$0xff]
  %v1531 = vld [vmem:[%s3 + $0x1b8] sm:$0xff]
  %v1540 = vunpack.c.l.b16 %v1524
  %v1541 = vunpack.c.h.b16 %v1524
  %v1542 = vunpack.c.l.b16 %v1525
  %v1543 = vunpack.c.h.b16 %v1525
  %v1544 = vunpack.c.l.b16 %v1526
  %v1545 = vunpack.c.h.b16 %v1526
  %v1546 = vunpack.c.l.b16 %v1527
  %v1547 = vunpack.c.h.b16 %v1527
  %v1548 = vunpack.c.l.b16 %v1528
  %v1549 = vunpack.c.h.b16 %v1528
  %v1550 = vunpack.c.l.b16 %v1529
  %v1551 = vunpack.c.h.b16 %v1529
  %v1552 = vunpack.c.l.b16 %v1530
  %v1553 = vunpack.c.h.b16 %v1530
  %v1554 = vunpack.c.l.b16 %v1531
  %v1555 = vunpack.c.h.b16 %v1531
  %v1556 = vpack.c.b16 %v1544, %v1540
  %v1557 = vpack.c.b16 %v1545, %v1541
  %v1558 = vpack.c.b16 %v1546, %v1542
  %v1559 = vpack.c.b16 %v1547, %v1543
  %v1560 = vpack.c.b16 %v1552, %v1548
  %v1561 = vpack.c.b16 %v1553, %v1549
  %v1562 = vpack.c.b16 %v1554, %v1550
  %v1563 = vpack.c.b16 %v1555, %v1551
  %v1573 = vsel %vm761, %v702, 0
  %1575 = vmatprep.subr.bf16.mxu0 %v1557
  %1576 = vmatpush1.bf16.msra.mxu0 %v1556
  %1577 = vmatprep.subr.bf16.mxu0 %v1561
  %1578 = vmatpush1.bf16.msra.mxu0 %v1560
  %1579 = vmatprep.subr.bf16.mxu0 0
  %1580 = vmatpush1.bf16.msra.mxu0 0
  %1581 = vmatprep.subr.bf16.mxu0 0
  %1582 = vmatpush1.bf16.msra.mxu0 0
  %1583 = vmatprep.subr.bf16.mxu0 0
  %1584 = vmatpush1.bf16.msra.mxu0 0
  %1585 = vmatprep.subr.bf16.mxu0 0
  %1586 = vmatpush1.bf16.msra.mxu0 0
  %1587 = vmatprep.subr.bf16.mxu0 0
  %1588 = vmatpush1.bf16.msra.mxu0 0
  %1589 = vmatprep.subr.bf16.mxu0 0
  %1590 = vmatpush1.bf16.msra.mxu0 0
  %1591 = vmatprep.subr.bf16.mxu0 0
  %1592 = vmatpush1.bf16.msra.mxu0 0
  %1593 = vmatprep.subr.bf16.mxu0 0
  %1594 = vmatpush1.bf16.msra.mxu0 0
  %1595 = vmatprep.subr.bf16.mxu0 0
  %1596 = vmatpush1.bf16.msra.mxu0 0
  %1597 = vmatprep.subr.bf16.mxu0 0
  %1598 = vmatpush1.bf16.msra.mxu0 0
  %1599 = vmatprep.subr.bf16.mxu0 0
  %1600 = vmatpush1.bf16.msra.mxu0 0
  %1601 = vmatprep.subr.bf16.mxu0 0
  %1602 = vmatpush1.bf16.msra.mxu0 0
  %1603 = vmatprep.subr.bf16.mxu0 0
  %1604 = vmatpush1.bf16.msra.mxu0 0
  %1605 = vmatprep.subr.bf16.mxu0 0
  %1606 = vmatpush1.bf16.msra.mxu0 0
  %1607 = vmatprep.mubr.bf16.mxu0 0
  %1608 = vmatmul.mubr.bf16.gmra.mrb[0].mxu0 %v1573
  %v1609 = vpop.f32.mrb[0].mxu0
  %v1610 = vadd.f32 0.0, %v1609
  %v1611 = vpop.f32.mrb[0].mxu0
  %v1612 = vadd.f32 0.0, %v1611
  %v1613 = vpop.f32.mrb[0].mxu0
  %v1614 = vpop.f32.mrb[0].mxu0
  %1615 = vdwg.mxu0
  %1616 = vmatprep.subr.bf16.mxu0 %v1559
  %1617 = vmatpush1.bf16.msra.mxu0 %v1558
  %1618 = vmatprep.subr.bf16.mxu0 %v1563
  %1619 = vmatpush1.bf16.msra.mxu0 %v1562
  %1620 = vmatprep.subr.bf16.mxu0 0
  %1621 = vmatpush1.bf16.msra.mxu0 0
  %1622 = vmatprep.subr.bf16.mxu0 0
  %1623 = vmatpush1.bf16.msra.mxu0 0
  %1624 = vmatprep.subr.bf16.mxu0 0
  %1625 = vmatpush1.bf16.msra.mxu0 0
  %1626 = vmatprep.subr.bf16.mxu0 0
  %1627 = vmatpush1.bf16.msra.mxu0 0
  %1628 = vmatprep.subr.bf16.mxu0 0
  %1629 = vmatpush1.bf16.msra.mxu0 0
  %1630 = vmatprep.subr.bf16.mxu0 0
  %1631 = vmatpush1.bf16.msra.mxu0 0
  %1632 = vmatprep.subr.bf16.mxu0 0
  %1633 = vmatpush1.bf16.msra.mxu0 0
  %1634 = vmatprep.subr.bf16.mxu0 0
  %1635 = vmatpush1.bf16.msra.mxu0 0
  %1636 = vmatprep.subr.bf16.mxu0 0
  %1637 = vmatpush1.bf16.msra.mxu0 0
  %1638 = vmatprep.subr.bf16.mxu0 0
  %1639 = vmatpush1.bf16.msra.mxu0 0
  %1640 = vmatprep.subr.bf16.mxu0 0
  %1641 = vmatpush1.bf16.msra.mxu0 0
  %1642 = vmatprep.subr.bf16.mxu0 0
  %1643 = vmatpush1.bf16.msra.mxu0 0
  %1644 = vmatprep.subr.bf16.mxu0 0
  %1645 = vmatpush1.bf16.msra.mxu0 0
  %1646 = vmatprep.subr.bf16.mxu0 0
  %1647 = vmatpush1.bf16.msra.mxu0 0
  %1648 = vmatprep.mubr.bf16.mxu0 0
  %1649 = vmatmul.mubr.bf16.gmra.mrb[0].mxu0 %v1573
  %v1650 = vpop.f32.mrb[0].mxu0
  %v1651 = vadd.f32 0.0, %v1650
  %v1652 = vpop.f32.mrb[0].mxu0
  %v1653 = vadd.f32 0.0, %v1652
  %v1654 = vpop.f32.mrb[0].mxu0
  %v1655 = vpop.f32.mrb[0].mxu0
  %1656 = vdwg.mxu0
  %v1657 = vadd.f32 %v1520, %v1610
  %v1658 = vadd.f32 %v1521, %v1612
  %v1659 = vadd.f32 %v1522, %v1651
  %v1660 = vadd.f32 %v1523, %v1653
  %v1661 = vld [vmem:[%s3 + $0x1c0] sm:$0xff]
  %v1662 = vld [vmem:[%s3 + $0x1c8] sm:$0xff]
  %v1663 = vld [vmem:[%s3 + $0x1d0] sm:$0xff]
  %v1664 = vld [vmem:[%s3 + $0x1d8] sm:$0xff]
  %v1665 = vld [vmem:[%s3 + $0x1e0] sm:$0xff]
  %v1666 = vld [vmem:[%s3 + $0x1e8] sm:$0xff]
  %v1667 = vld [vmem:[%s3 + $0x1f0] sm:$0xff]
  %v1668 = vld [vmem:[%s3 + $0x1f8] sm:$0xff]
  %v1670 = vrot.slane %v702, 4
  %v1679 = vunpack.c.l.b16 %v1661
  %v1680 = vunpack.c.h.b16 %v1661
  %v1681 = vunpack.c.l.b16 %v1662
  %v1682 = vunpack.c.h.b16 %v1662
  %v1683 = vunpack.c.l.b16 %v1663
  %v1684 = vunpack.c.h.b16 %v1663
  %v1685 = vunpack.c.l.b16 %v1664
  %v1686 = vunpack.c.h.b16 %v1664
  %v1687 = vunpack.c.l.b16 %v1665
  %v1688 = vunpack.c.h.b16 %v1665
  %v1689 = vunpack.c.l.b16 %v1666
  %v1690 = vunpack.c.h.b16 %v1666
  %v1691 = vunpack.c.l.b16 %v1667
  %v1692 = vunpack.c.h.b16 %v1667
  %v1693 = vunpack.c.l.b16 %v1668
  %v1694 = vunpack.c.h.b16 %v1668
  %v1695 = vpack.c.b16 %v1683, %v1679
  %v1696 = vpack.c.b16 %v1684, %v1680
  %v1697 = vpack.c.b16 %v1685, %v1681
  %v1698 = vpack.c.b16 %v1686, %v1682
  %v1699 = vpack.c.b16 %v1691, %v1687
  %v1700 = vpack.c.b16 %v1692, %v1688
  %v1701 = vpack.c.b16 %v1693, %v1689
  %v1702 = vpack.c.b16 %v1694, %v1690
  %v1712 = vsel %vm761, %v1670, 0
  %1714 = vmatprep.subr.bf16.mxu0 %v1696
  %1715 = vmatpush1.bf16.msra.mxu0 %v1695
  %1716 = vmatprep.subr.bf16.mxu0 %v1700
  %1717 = vmatpush1.bf16.msra.mxu0 %v1699
  %1718 = vmatprep.subr.bf16.mxu0 0
  %1719 = vmatpush1.bf16.msra.mxu0 0
  %1720 = vmatprep.subr.bf16.mxu0 0
  %1721 = vmatpush1.bf16.msra.mxu0 0
  %1722 = vmatprep.subr.bf16.mxu0 0
  %1723 = vmatpush1.bf16.msra.mxu0 0
  %1724 = vmatprep.subr.bf16.mxu0 0
  %1725 = vmatpush1.bf16.msra.mxu0 0
  %1726 = vmatprep.subr.bf16.mxu0 0
  %1727 = vmatpush1.bf16.msra.mxu0 0
  %1728 = vmatprep.subr.bf16.mxu0 0
  %1729 = vmatpush1.bf16.msra.mxu0 0
  %1730 = vmatprep.subr.bf16.mxu0 0
  %1731 = vmatpush1.bf16.msra.mxu0 0
  %1732 = vmatprep.subr.bf16.mxu0 0
  %1733 = vmatpush1.bf16.msra.mxu0 0
  %1734 = vmatprep.subr.bf16.mxu0 0
  %1735 = vmatpush1.bf16.msra.mxu0 0
  %1736 = vmatprep.subr.bf16.mxu0 0
  %1737 = vmatpush1.bf16.msra.mxu0 0
  %1738 = vmatprep.subr.bf16.mxu0 0
  %1739 = vmatpush1.bf16.msra.mxu0 0
  %1740 = vmatprep.subr.bf16.mxu0 0
  %1741 = vmatpush1.bf16.msra.mxu0 0
  %1742 = vmatprep.subr.bf16.mxu0 0
  %1743 = vmatpush1.bf16.msra.mxu0 0
  %1744 = vmatprep.subr.bf16.mxu0 0
  %1745 = vmatpush1.bf16.msra.mxu0 0
  %1746 = vmatprep.mubr.bf16.mxu0 0
  %1747 = vmatmul.mubr.bf16.gmra.mrb[0].mxu0 %v1712
  %v1748 = vpop.f32.mrb[0].mxu0
  %v1749 = vadd.f32 0.0, %v1748
  %v1750 = vpop.f32.mrb[0].mxu0
  %v1751 = vadd.f32 0.0, %v1750
  %v1752 = vpop.f32.mrb[0].mxu0
  %v1753 = vpop.f32.mrb[0].mxu0
  %1754 = vdwg.mxu0
  %1755 = vmatprep.subr.bf16.mxu0 %v1698
  %1756 = vmatpush1.bf16.msra.mxu0 %v1697
  %1757 = vmatprep.subr.bf16.mxu0 %v1702
  %1758 = vmatpush1.bf16.msra.mxu0 %v1701
  %1759 = vmatprep.subr.bf16.mxu0 0
  %1760 = vmatpush1.bf16.msra.mxu0 0
  %1761 = vmatprep.subr.bf16.mxu0 0
  %1762 = vmatpush1.bf16.msra.mxu0 0
  %1763 = vmatprep.subr.bf16.mxu0 0
  %1764 = vmatpush1.bf16.msra.mxu0 0
  %1765 = vmatprep.subr.bf16.mxu0 0
  %1766 = vmatpush1.bf16.msra.mxu0 0
  %1767 = vmatprep.subr.bf16.mxu0 0
  %1768 = vmatpush1.bf16.msra.mxu0 0
  %1769 = vmatprep.subr.bf16.mxu0 0
  %1770 = vmatpush1.bf16.msra.mxu0 0
  %1771 = vmatprep.subr.bf16.mxu0 0
  %1772 = vmatpush1.bf16.msra.mxu0 0
  %1773 = vmatprep.subr.bf16.mxu0 0
  %1774 = vmatpush1.bf16.msra.mxu0 0
  %1775 = vmatprep.subr.bf16.mxu0 0
  %1776 = vmatpush1.bf16.msra.mxu0 0
  %1777 = vmatprep.subr.bf16.mxu0 0
  %1778 = vmatpush1.bf16.msra.mxu0 0
  %1779 = vmatprep.subr.bf16.mxu0 0
  %1780 = vmatpush1.bf16.msra.mxu0 0
  %1781 = vmatprep.subr.bf16.mxu0 0
  %1782 = vmatpush1.bf16.msra.mxu0 0
  %1783 = vmatprep.subr.bf16.mxu0 0
  %1784 = vmatpush1.bf16.msra.mxu0 0
  %1785 = vmatprep.subr.bf16.mxu0 0
  %1786 = vmatpush1.bf16.msra.mxu0 0
  %1787 = vmatprep.mubr.bf16.mxu0 0
  %1788 = vmatmul.mubr.bf16.gmra.mrb[0].mxu0 %v1712
  %v1789 = vpop.f32.mrb[0].mxu0
  %v1790 = vadd.f32 0.0, %v1789
  %v1791 = vpop.f32.mrb[0].mxu0
  %v1792 = vadd.f32 0.0, %v1791
  %v1793 = vpop.f32.mrb[0].mxu0
  %v1794 = vpop.f32.mrb[0].mxu0
  %1795 = vdwg.mxu0
  %v1796 = vadd.f32 %v1657, %v1749
  %v1797 = vadd.f32 %v1658, %v1751
  %v1798 = vadd.f32 %v1659, %v1790
  %v1799 = vadd.f32 %v1660, %v1792
  %v1800 = vld [vmem:[%s4] sm:$0xf]
  %v1802 = vlaneseq
  %v1803 = vshrl.u32 %v1802, 7
  %v1804 = vsub.s32 0, %v1803
  %v1805 = vrot.slane %v1800, %v1804
  %v1806 = vlaneseq
  %v1807 = vshrl.u32 %v1806, 7
  %v1808 = vsub.s32 1, %v1807
  %v1809 = vrot.slane %v1800, %v1808
  %v1810 = vlaneseq
  %v1811 = vshrl.u32 %v1810, 7
  %v1812 = vsub.s32 2, %v1811
  %v1813 = vrot.slane %v1800, %v1812
  %v1814 = vlaneseq
  %v1815 = vshrl.u32 %v1814, 7
  %v1816 = vsub.s32 3, %v1815
  %v1817 = vrot.slane %v1800, %v1816
  %v1822 = vadd.f32 %v1796, %v1805
  %v1823 = vadd.f32 %v1797, %v1809
  %v1824 = vadd.f32 %v1798, %v1813
  %v1825 = vadd.f32 %v1799, %v1817
  %v1826 = vmax.f32 %v1822, 0.0
  %v1827 = vmax.f32 %v1823, 0.0
  %v1828 = vmax.f32 %v1824, 0.0
  %v1829 = vmax.f32 %v1825, 0.0
  %v1830 = vpack.c.bf16 %v1826, %v1826
  %v1831 = vpack.c.bf16 %v1827, %v1827
  %v1832 = vpack.c.bf16 %v1828, %v1828
  %v1833 = vpack.c.bf16 %v1829, %v1829
  %v1834 = vld [vmem:[%s5] sm:$0xf]
  %v1835 = vld [vmem:[%s5 + $0x4] sm:$0xf]
  %v1836 = vld [vmem:[%s5 + $0x8] sm:$0xf]
  %v1837 = vld [vmem:[%s5 + $0xc] sm:$0xf]
  %v1838 = vld [vmem:[%s5 + $0x10] sm:$0xf]
  %v1839 = vld [vmem:[%s5 + $0x14] sm:$0xf]
  %v1840 = vld [vmem:[%s5 + $0x18] sm:$0xf]
  %v1841 = vld [vmem:[%s5 + $0x1c] sm:$0xf]
  %v1842 = vld [vmem:[%s5 + $0x20] sm:$0xf]
  %v1843 = vld [vmem:[%s5 + $0x24] sm:$0xf]
  %v1844 = vld [vmem:[%s5 + $0x28] sm:$0xf]
  %v1845 = vld [vmem:[%s5 + $0x2c] sm:$0xf]
  %v1846 = vld [vmem:[%s5 + $0x30] sm:$0xf]
  %v1847 = vld [vmem:[%s5 + $0x34] sm:$0xf]
  %v1848 = vld [vmem:[%s5 + $0x38] sm:$0xf]
  %v1849 = vld [vmem:[%s5 + $0x3c] sm:$0xf]
  %v1850 = vld [vmem:[%s5 + $0x40] sm:$0xf]
  %v1851 = vld [vmem:[%s5 + $0x44] sm:$0xf]
  %v1852 = vld [vmem:[%s5 + $0x48] sm:$0xf]
  %v1853 = vld [vmem:[%s5 + $0x4c] sm:$0xf]
  %v1854 = vld [vmem:[%s5 + $0x50] sm:$0xf]
  %v1855 = vld [vmem:[%s5 + $0x54] sm:$0xf]
  %v1856 = vld [vmem:[%s5 + $0x58] sm:$0xf]
  %v1857 = vld [vmem:[%s5 + $0x5c] sm:$0xf]
  %v1858 = vld [vmem:[%s5 + $0x60] sm:$0xf]
  %v1859 = vld [vmem:[%s5 + $0x64] sm:$0xf]
  %v1860 = vld [vmem:[%s5 + $0x68] sm:$0xf]
  %v1861 = vld [vmem:[%s5 + $0x6c] sm:$0xf]
  %v1862 = vld [vmem:[%s5 + $0x70] sm:$0xf]
  %v1863 = vld [vmem:[%s5 + $0x74] sm:$0xf]
  %v1864 = vld [vmem:[%s5 + $0x78] sm:$0xf]
  %v1865 = vld [vmem:[%s5 + $0x7c] sm:$0xf]
  %v1866 = vld [vmem:[%s5 + $0x80] sm:$0xf]
  %v1867 = vld [vmem:[%s5 + $0x84] sm:$0xf]
  %v1868 = vld [vmem:[%s5 + $0x88] sm:$0xf]
  %v1869 = vld [vmem:[%s5 + $0x8c] sm:$0xf]
  %v1870 = vld [vmem:[%s5 + $0x90] sm:$0xf]
  %v1871 = vld [vmem:[%s5 + $0x94] sm:$0xf]
  %v1872 = vld [vmem:[%s5 + $0x98] sm:$0xf]
  %v1873 = vld [vmem:[%s5 + $0x9c] sm:$0xf]
  %v1874 = vld [vmem:[%s5 + $0xa0] sm:$0xf]
  %v1875 = vld [vmem:[%s5 + $0xa4] sm:$0xf]
  %v1876 = vld [vmem:[%s5 + $0xa8] sm:$0xf]
  %v1877 = vld [vmem:[%s5 + $0xac] sm:$0xf]
  %v1878 = vld [vmem:[%s5 + $0xb0] sm:$0xf]
  %v1879 = vld [vmem:[%s5 + $0xb4] sm:$0xf]
  %v1880 = vld [vmem:[%s5 + $0xb8] sm:$0xf]
  %v1881 = vld [vmem:[%s5 + $0xbc] sm:$0xf]
  %v1882 = vld [vmem:[%s5 + $0xc0] sm:$0xf]
  %v1883 = vld [vmem:[%s5 + $0xc4] sm:$0xf]
  %v1884 = vld [vmem:[%s5 + $0xc8] sm:$0xf]
  %v1885 = vld [vmem:[%s5 + $0xcc] sm:$0xf]
  %v1886 = vld [vmem:[%s5 + $0xd0] sm:$0xf]
  %v1887 = vld [vmem:[%s5 + $0xd4] sm:$0xf]
  %v1888 = vld [vmem:[%s5 + $0xd8] sm:$0xf]
  %v1889 = vld [vmem:[%s5 + $0xdc] sm:$0xf]
  %v1890 = vld [vmem:[%s5 + $0xe0] sm:$0xf]
  %v1891 = vld [vmem:[%s5 + $0xe4] sm:$0xf]
  %v1892 = vld [vmem:[%s5 + $0xe8] sm:$0xf]
  %v1893 = vld [vmem:[%s5 + $0xec] sm:$0xf]
  %v1894 = vld [vmem:[%s5 + $0xf0] sm:$0xf]
  %v1895 = vld [vmem:[%s5 + $0xf4] sm:$0xf]
  %v1896 = vld [vmem:[%s5 + $0xf8] sm:$0xf]
  %v1897 = vld [vmem:[%s5 + $0xfc] sm:$0xf]
  %v1898 = vld [vmem:[%s6] sm:$0x1]
  %v1900 = vlaneseq
  %v1901 = vshrl.u32 %v1900, 7
  %v1902 = vsub.s32 0, %v1901
  %v1903 = vrot.slane %v1898, %v1902
  %v1969 = vunpack.c.l.b16 %v1834
  %v1970 = vunpack.c.l.b16 %v1835
  %v1971 = vunpack.c.l.b16 %v1836
  %v1972 = vunpack.c.l.b16 %v1837
  %v1973 = vunpack.c.l.b16 %v1838
  %v1974 = vunpack.c.l.b16 %v1839
  %v1975 = vunpack.c.l.b16 %v1840
  %v1976 = vunpack.c.l.b16 %v1841
  %v1977 = vunpack.c.l.b16 %v1842
  %v1978 = vunpack.c.l.b16 %v1843
  %v1979 = vunpack.c.l.b16 %v1844
  %v1980 = vunpack.c.l.b16 %v1845
  %v1981 = vunpack.c.l.b16 %v1846
  %v1982 = vunpack.c.l.b16 %v1847
  %v1983 = vunpack.c.l.b16 %v1848
  %v1984 = vunpack.c.l.b16 %v1849
  %v1985 = vunpack.c.l.b16 %v1850
  %v1986 = vunpack.c.l.b16 %v1851
  %v1987 = vunpack.c.l.b16 %v1852
  %v1988 = vunpack.c.l.b16 %v1853
  %v1989 = vunpack.c.l.b16 %v1854
  %v1990 = vunpack.c.l.b16 %v1855
  %v1991 = vunpack.c.l.b16 %v1856
  %v1992 = vunpack.c.l.b16 %v1857
  %v1993 = vunpack.c.l.b16 %v1858
  %v1994 = vunpack.c.l.b16 %v1859
  %v1995 = vunpack.c.l.b16 %v1860
  %v1996 = vunpack.c.l.b16 %v1861
  %v1997 = vunpack.c.l.b16 %v1862
  %v1998 = vunpack.c.l.b16 %v1863
  %v1999 = vunpack.c.l.b16 %v1864
  %v2000 = vunpack.c.l.b16 %v1865
  %v2001 = vunpack.c.l.b16 %v1866
  %v2002 = vunpack.c.l.b16 %v1867
  %v2003 = vunpack.c.l.b16 %v1868
  %v2004 = vunpack.c.l.b16 %v1869
  %v2005 = vunpack.c.l.b16 %v1870
  %v2006 = vunpack.c.l.b16 %v1871
  %v2007 = vunpack.c.l.b16 %v1872
  %v2008 = vunpack.c.l.b16 %v1873
  %v2009 = vunpack.c.l.b16 %v1874
  %v2010 = vunpack.c.l.b16 %v1875
  %v2011 = vunpack.c.l.b16 %v1876
  %v2012 = vunpack.c.l.b16 %v1877
  %v2013 = vunpack.c.l.b16 %v1878
  %v2014 = vunpack.c.l.b16 %v1879
  %v2015 = vunpack.c.l.b16 %v1880
  %v2016 = vunpack.c.l.b16 %v1881
  %v2017 = vunpack.c.l.b16 %v1882
  %v2018 = vunpack.c.l.b16 %v1883
  %v2019 = vunpack.c.l.b16 %v1884
  %v2020 = vunpack.c.l.b16 %v1885
  %v2021 = vunpack.c.l.b16 %v1886
  %v2022 = vunpack.c.l.b16 %v1887
  %v2023 = vunpack.c.l.b16 %v1888
  %v2024 = vunpack.c.l.b16 %v1889
  %v2025 = vunpack.c.l.b16 %v1890
  %v2026 = vunpack.c.l.b16 %v1891
  %v2027 = vunpack.c.l.b16 %v1892
  %v2028 = vunpack.c.l.b16 %v1893
  %v2029 = vunpack.c.l.b16 %v1894
  %v2030 = vunpack.c.l.b16 %v1895
  %v2031 = vunpack.c.l.b16 %v1896
  %v2032 = vunpack.c.l.b16 %v1897
  %v2033 = vpack.c.b16 %v1970, %v1969
  %v2034 = vpack.c.b16 %v1972, %v1971
  %v2035 = vpack.c.b16 %v1974, %v1973
  %v2036 = vpack.c.b16 %v1976, %v1975
  %v2037 = vpack.c.b16 %v1978, %v1977
  %v2038 = vpack.c.b16 %v1980, %v1979
  %v2039 = vpack.c.b16 %v1982, %v1981
  %v2040 = vpack.c.b16 %v1984, %v1983
  %v2041 = vpack.c.b16 %v1986, %v1985
  %v2042 = vpack.c.b16 %v1988, %v1987
  %v2043 = vpack.c.b16 %v1990, %v1989
  %v2044 = vpack.c.b16 %v1992, %v1991
  %v2045 = vpack.c.b16 %v1994, %v1993
  %v2046 = vpack.c.b16 %v1996, %v1995
  %v2047 = vpack.c.b16 %v1998, %v1997
  %v2048 = vpack.c.b16 %v2000, %v1999
  %v2049 = vpack.c.b16 %v2002, %v2001
  %v2050 = vpack.c.b16 %v2004, %v2003
  %v2051 = vpack.c.b16 %v2006, %v2005
  %v2052 = vpack.c.b16 %v2008, %v2007
  %v2053 = vpack.c.b16 %v2010, %v2009
  %v2054 = vpack.c.b16 %v2012, %v2011
  %v2055 = vpack.c.b16 %v2014, %v2013
  %v2056 = vpack.c.b16 %v2016, %v2015
  %v2057 = vpack.c.b16 %v2018, %v2017
  %v2058 = vpack.c.b16 %v2020, %v2019
  %v2059 = vpack.c.b16 %v2022, %v2021
  %v2060 = vpack.c.b16 %v2024, %v2023
  %v2061 = vpack.c.b16 %v2026, %v2025
  %v2062 = vpack.c.b16 %v2028, %v2027
  %v2063 = vpack.c.b16 %v2030, %v2029
  %v2064 = vpack.c.b16 %v2032, %v2031
  %2097 = vmatprep.subr.bf16.mxu0 0
  %2098 = vmatpush1.bf16.msra.mxu0 %v2033
  %2099 = vmatprep.subr.bf16.mxu0 0
  %2100 = vmatpush1.bf16.msra.mxu0 %v2034
  %2101 = vmatprep.subr.bf16.mxu0 0
  %2102 = vmatpush1.bf16.msra.mxu0 %v2035
  %2103 = vmatprep.subr.bf16.mxu0 0
  %2104 = vmatpush1.bf16.msra.mxu0 %v2036
  %2105 = vmatprep.subr.bf16.mxu0 0
  %2106 = vmatpush1.bf16.msra.mxu0 %v2037
  %2107 = vmatprep.subr.bf16.mxu0 0
  %2108 = vmatpush1.bf16.msra.mxu0 %v2038
  %2109 = vmatprep.subr.bf16.mxu0 0
  %2110 = vmatpush1.bf16.msra.mxu0 %v2039
  %2111 = vmatprep.subr.bf16.mxu0 0
  %2112 = vmatpush1.bf16.msra.mxu0 %v2040
  %2113 = vmatprep.subr.bf16.mxu0 0
  %2114 = vmatpush1.bf16.msra.mxu0 %v2041
  %2115 = vmatprep.subr.bf16.mxu0 0
  %2116 = vmatpush1.bf16.msra.mxu0 %v2042
  %2117 = vmatprep.subr.bf16.mxu0 0
  %2118 = vmatpush1.bf16.msra.mxu0 %v2043
  %2119 = vmatprep.subr.bf16.mxu0 0
  %2120 = vmatpush1.bf16.msra.mxu0 %v2044
  %2121 = vmatprep.subr.bf16.mxu0 0
  %2122 = vmatpush1.bf16.msra.mxu0 %v2045
  %2123 = vmatprep.subr.bf16.mxu0 0
  %2124 = vmatpush1.bf16.msra.mxu0 %v2046
  %2125 = vmatprep.subr.bf16.mxu0 0
  %2126 = vmatpush1.bf16.msra.mxu0 %v2047
  %2127 = vmatprep.subr.bf16.mxu0 0
  %2128 = vmatpush1.bf16.msra.mxu0 %v2048
  %2129 = vmatprep.mubr.bf16.mxu0 %v1831
  %2130 = vmatmul.mubr.bf16.gmra.mrb[0].mxu0 %v1830
  %v2131 = vpop.f32.mrb[0].mxu0
  %v2132 = vadd.f32 %v1903, %v2131
  %v2133 = vpop.f32.mrb[0].mxu0
  %v2134 = vpop.f32.mrb[0].mxu0
  %v2135 = vpop.f32.mrb[0].mxu0
  %2136 = vdwg.mxu0
  %2137 = vmatprep.subr.bf16.mxu0 0
  %2138 = vmatpush1.bf16.msra.mxu0 %v2049
  %2139 = vmatprep.subr.bf16.mxu0 0
  %2140 = vmatpush1.bf16.msra.mxu0 %v2050
  %2141 = vmatprep.subr.bf16.mxu0 0
  %2142 = vmatpush1.bf16.msra.mxu0 %v2051
  %2143 = vmatprep.subr.bf16.mxu0 0
  %2144 = vmatpush1.bf16.msra.mxu0 %v2052
  %2145 = vmatprep.subr.bf16.mxu0 0
  %2146 = vmatpush1.bf16.msra.mxu0 %v2053
  %2147 = vmatprep.subr.bf16.mxu0 0
  %2148 = vmatpush1.bf16.msra.mxu0 %v2054
  %2149 = vmatprep.subr.bf16.mxu0 0
  %2150 = vmatpush1.bf16.msra.mxu0 %v2055
  %2151 = vmatprep.subr.bf16.mxu0 0
  %2152 = vmatpush1.bf16.msra.mxu0 %v2056
  %2153 = vmatprep.subr.bf16.mxu0 0
  %2154 = vmatpush1.bf16.msra.mxu0 %v2057
  %2155 = vmatprep.subr.bf16.mxu0 0
  %2156 = vmatpush1.bf16.msra.mxu0 %v2058
  %2157 = vmatprep.subr.bf16.mxu0 0
  %2158 = vmatpush1.bf16.msra.mxu0 %v2059
  %2159 = vmatprep.subr.bf16.mxu0 0
  %2160 = vmatpush1.bf16.msra.mxu0 %v2060
  %2161 = vmatprep.subr.bf16.mxu0 0
  %2162 = vmatpush1.bf16.msra.mxu0 %v2061
  %2163 = vmatprep.subr.bf16.mxu0 0
  %2164 = vmatpush1.bf16.msra.mxu0 %v2062
  %2165 = vmatprep.subr.bf16.mxu0 0
  %2166 = vmatpush1.bf16.msra.mxu0 %v2063
  %2167 = vmatprep.subr.bf16.mxu0 0
  %2168 = vmatpush1.bf16.msra.mxu0 %v2064
  %2169 = vmatprep.mubr.bf16.mxu0 %v1833
  %2170 = vmatmul.mubr.bf16.gmra.mrb[0].mxu0 %v1832
  %v2171 = vpop.f32.mrb[0].mxu0
  %v2172 = vadd.f32 %v2132, %v2171
  %v2173 = vpop.f32.mrb[0].mxu0
  %v2174 = vpop.f32.mrb[0].mxu0
  %v2175 = vpop.f32.mrb[0].mxu0
  %2176 = vdwg.mxu0
  %v2177 = vpack.c.bf16 %v2172, %v2172
  %v2178 = vld [vmem:[%s7] sm:$0xf]
  %v2179 = vld [vmem:[%s7 + $0x4] sm:$0xf]
  %v2180 = vld [vmem:[%s7 + $0x8] sm:$0xf]
  %v2181 = vld [vmem:[%s7 + $0xc] sm:$0xf]
  %v2182 = vld [vmem:[%s7 + $0x10] sm:$0xf]
  %v2183 = vld [vmem:[%s7 + $0x14] sm:$0xf]
  %v2184 = vld [vmem:[%s7 + $0x18] sm:$0xf]
  %v2185 = vld [vmem:[%s7 + $0x1c] sm:$0xf]
  %v2186 = vld [vmem:[%s8] sm:$0x1]
  %v2188 = vlaneseq
  %v2189 = vshrl.u32 %v2188, 7
  %v2190 = vsub.s32 0, %v2189
  %v2191 = vrot.slane %v2186, %v2190
  %v2201 = vunpack.c.l.b16 %v2178
  %v2202 = vunpack.c.l.b16 %v2179
  %v2203 = vunpack.c.l.b16 %v2180
  %v2204 = vunpack.c.l.b16 %v2181
  %v2205 = vunpack.c.l.b16 %v2182
  %v2206 = vunpack.c.l.b16 %v2183
  %v2207 = vunpack.c.l.b16 %v2184
  %v2208 = vunpack.c.l.b16 %v2185
  %v2209 = vpack.c.b16 %v2202, %v2201
  %v2210 = vpack.c.b16 %v2204, %v2203
  %v2211 = vpack.c.b16 %v2206, %v2205
  %v2212 = vpack.c.b16 %v2208, %v2207
  %vm2217 = vcmask 523264
  %v2219 = vsel %vm2217, %v2177, 0
  %2221 = vmatprep.subr.bf16.mxu0 0
  %2222 = vmatpush1.bf16.msra.mxu0 %v2209
  %2223 = vmatprep.subr.bf16.mxu0 0
  %2224 = vmatpush1.bf16.msra.mxu0 %v2210
  %2225 = vmatprep.subr.bf16.mxu0 0
  %2226 = vmatpush1.bf16.msra.mxu0 %v2211
  %2227 = vmatprep.subr.bf16.mxu0 0
  %2228 = vmatpush1.bf16.msra.mxu0 %v2212
  %2229 = vmatprep.subr.bf16.mxu0 0
  %2230 = vmatpush1.bf16.msra.mxu0 0
  %2231 = vmatprep.subr.bf16.mxu0 0
  %2232 = vmatpush1.bf16.msra.mxu0 0
  %2233 = vmatprep.subr.bf16.mxu0 0
  %2234 = vmatpush1.bf16.msra.mxu0 0
  %2235 = vmatprep.subr.bf16.mxu0 0
  %2236 = vmatpush1.bf16.msra.mxu0 0
  %2237 = vmatprep.subr.bf16.mxu0 0
  %2238 = vmatpush1.bf16.msra.mxu0 0
  %2239 = vmatprep.subr.bf16.mxu0 0
  %2240 = vmatpush1.bf16.msra.mxu0 0
  %2241 = vmatprep.subr.bf16.mxu0 0
  %2242 = vmatpush1.bf16.msra.mxu0 0
  %2243 = vmatprep.subr.bf16.mxu0 0
  %2244 = vmatpush1.bf16.msra.mxu0 0
  %2245 = vmatprep.subr.bf16.mxu0 0
  %2246 = vmatpush1.bf16.msra.mxu0 0
  %2247 = vmatprep.subr.bf16.mxu0 0
  %2248 = vmatpush1.bf16.msra.mxu0 0
  %2249 = vmatprep.subr.bf16.mxu0 0
  %2250 = vmatpush1.bf16.msra.mxu0 0
  %2251 = vmatprep.subr.bf16.mxu0 0
  %2252 = vmatpush1.bf16.msra.mxu0 0
  %2253 = vmatprep.mubr.bf16.mxu0 0
  %2254 = vmatmul.mubr.bf16.gmra.mrb[0].mxu0 %v2219
  %v2255 = vpop.f32.mrb[0].mxu0
  %v2256 = vadd.f32 %v2191, %v2255
  %v2257 = vpop.f32.mrb[0].mxu0
  %v2258 = vpop.f32.mrb[0].mxu0
  %v2259 = vpop.f32.mrb[0].mxu0
  %2260 = vdwg.mxu0
  %2261 = vst [vmem:[%s9] sm:$0xff] %v2256
  // Predicated region
  $region38: #{trn_forward.1} parent=0 // pred_check
    _
  $region39: #{trn_forward.1} parent=0 // pred_check_branch
    %2263 = sbr.rel (0) target = $region41
  $region40: #{trn_forward.1} parent=0 // pred_region
    _
  $region41: #{trn_forward.1} parent=0 // pred_fallthru
    _
  // Predicated region
  $region42: #{trn_forward.1} parent=0 // pred_check
    _
  $region43: #{trn_forward.1} parent=0 // pred_check_branch
    %2265 = sbr.rel (0) target = $region45
  $region44: #{trn_forward.1} parent=0 // pred_region
    _
  $region45: #{trn_forward.1} parent=0 // pred_fallthru
    _

</llo_original>
